<compile_context>
chip_gen: v6e
topology: v6e:2x2x1
jax: 0.10.0
libtpu: 0.0.40
codegen_flags: <defaults>
</compile_context>

<pallas_src>
import jax
import jax.numpy as jnp
from jax import lax
from jax.experimental import pallas as pl
from jax.experimental.pallas import tpu as pltpu


def _round_up(x, m):
    return (x + m - 1) // m * m


def _pick_divisor_tile(full, target, quantum):
    """Largest multiple of `quantum` that is <= target and divides `full`."""
    assert full % quantum == 0
    if full <= target:
        return full
    t = max((min(target, full) // quantum) * quantum, quantum)
    while full % t != 0:
        t -= quantum
    return t


# ---------------------------------------------------------------------------
# Kernel 1: tiled matmul + bias (bf16 operands, f32 accumulation).
# Used for both hoisted big matmuls:
#   - layer-0 input projection:  (T*B, E) @ (E, 4H) + b0
#   - vocab head:                (B*T, H) @ (H, Vp) + bout
# Tiled over (M, N); K (embed / hidden size) stays untiled.
# ---------------------------------------------------------------------------
def _matmul_bias_kernel(x_ref, w_ref, b_ref, o_ref):
    x = x_ref[...].astype(w_ref.dtype)               # bf16 operands if w is bf16
    acc = jnp.dot(x, w_ref[...], preferred_element_type=jnp.float32)
    o_ref[...] = (acc + b_ref[...].astype(jnp.float32)).astype(o_ref.dtype)


def _matmul_bias(x, w, b, n_out, *, tm_target=256, tn_target=512):
    """(M, K) f32 @ (K, Np) [pre-padded, Np % 128 == 0] + (1, Np) -> (M, n_out) f32."""
    M, K = x.shape
    Np = w.shape[1]
    assert Np % 128 == 0 and b.shape == (1, Np)

    tm = min(_round_up(tm_target, 8), _round_up(M, 8))
    Mp = _round_up(M, tm)
    tn = _pick_divisor_tile(Np, tn_target, 128)

    # Only activations are padded per call (weights/bias are pre-padded at init).
    xp = x if Mp == M else jnp.pad(x, ((0, Mp - M), (0, 0)))

    # VMEM budget (x2 for default double buffering, x2 headroom), sized v7x-safe.
    tile_bytes = (tm * K * x.dtype.itemsize + K * tn * w.dtype.itemsize
                  + tn * b.dtype.itemsize + tm * tn * 4)
    vmem_limit = int(min(56 * 2**20, max(4 * tile_bytes, 32 * 2**20)))

    out = pl.pallas_call(
        _matmul_bias_kernel,
        out_shape=jax.ShapeDtypeStruct((Mp, Np), jnp.float32),
        grid_spec=pltpu.PrefetchScalarGridSpec(
            num_scalar_prefetch=0,
            grid=(Mp // tm, Np // tn),
            in_specs=[
                pl.BlockSpec((tm, K), lambda i, j: (i, 0)),
                pl.BlockSpec((K, tn), lambda i, j: (0, j)),
                pl.BlockSpec((1, tn), lambda i, j: (0, j)),
            ],
            out_specs=pl.BlockSpec((tm, tn), lambda i, j: (i, j)),
        ),
        compiler_params=pltpu.CompilerParams(
            dimension_semantics=("parallel", "parallel"),  # megacore-splittable on v7x
            vmem_limit_bytes=vmem_limit,
        ),
    )(xp, w, b)
    return out[:M, :n_out]


# ---------------------------------------------------------------------------
# Kernel 2: the serial 2-layer LSTM recurrence, all T steps in one kernel call.
# Single-buffered: no grid, whole operands resident in VMEM.
# ---------------------------------------------------------------------------
def _lstm_recurrent_kernel(g0_ref, whh0_ref, wih1_ref, whh1_ref, b1_ref, h1_out_ref):
    """g0_ref:    (T, Bp, 4H) precomputed x_t @ W_ih0 + b0 (no recurrent dependence)
       whh0_ref:  (H, 4H)     layer-0 recurrent weights (f32)
       wih1_ref:  (H, 4H)     layer-1 input weights (f32)
       whh1_ref:  (H, 4H)     layer-1 recurrent weights (f32)
       b1_ref:    (Bp, 4H)    layer-1 bias, pre-broadcast in the wrapper
       h1_out_ref:(T, Bp, H)  layer-1 hidden states (vocab head applied outside)
    """
    T, B, G = g0_ref.shape
    H = G // 4

    def cell(gates, c):
        # PyTorch gate order: i, f, g, o
        i = jax.nn.sigmoid(gates[:, 0 * H:1 * H])
        f = jax.nn.sigmoid(gates[:, 1 * H:2 * H])
        g = jnp.tanh(gates[:, 2 * H:3 * H])
        o = jax.nn.sigmoid(gates[:, 3 * H:4 * H])
        c_new = f * c + i * g
        return o * jnp.tanh(c_new), c_new

    def step(t, carry):
        h0, c0, h1, c1 = carry
        # Layer 0: input projection already folded into g0; only h @ W_hh0 here.
        # Weight refs are read inside the loop (MXU streams from VMEM; no hoisted copies).
        g0 = g0_ref[t] + jnp.dot(h0, whh0_ref[...], preferred_element_type=jnp.float32)
        h0, c0 = cell(g0, c0)
        # Layer 1 (inter-layer dropout skipped — eval semantics).
        g1 = (jnp.dot(h0, wih1_ref[...], preferred_element_type=jnp.float32)
              + jnp.dot(h1, whh1_ref[...], preferred_element_type=jnp.float32)
              + b1_ref[...])
        h1, c1 = cell(g1, c1)
        h1_out_ref[t] = h1.astype(h1_out_ref.dtype)
        return (h0, c0, h1, c1)

    zeros = jnp.zeros((B, H), jnp.float32)
    lax.fori_loop(0, T, step, (zeros, zeros, zeros, zeros))


# ---------------------------------------------------------------------------
# Wrapper
# ---------------------------------------------------------------------------
@jax.jit
def decoder_rnn_forward(features, captions, params):
    """features: (B, E) f32, captions: (B, S) int32 -> logits (B, S, V) f32."""
    emb_table = params["embedding"]          # (V, E), logical vocab size
    V, E = emb_table.shape
    B = features.shape[0]
    S = captions.shape[1]
    H = params["whh0"].shape[0]
    T = S                                    # last LSTM step is dropped by [:, :-1, :]

    # ---- glue in plain JAX: embedding gather, concat, batch pad, time-major ----
    embeddings = jnp.take(emb_table, captions, axis=0)            # (B, S, E)
    x = jnp.concatenate([features[:, None, :], embeddings], 1)    # (B, S+1, E)
    x = x[:, :T, :]                                               # drop unused last step
    Bp = _round_up(max(B, 8), 8)                                  # pad batch to sublane quantum
    x = jnp.pad(x, ((0, Bp - B), (0, 0), (0, 0)))
    x_tm = jnp.transpose(x, (1, 0, 2))                            # (T, Bp, E) time-major

    # ---- hoisted layer-0 input projection: one big (T*Bp, E) x (E, 4H) matmul (bf16 W) ----
    g0 = _matmul_bias(x_tm.reshape(T * Bp, E), params["wih0"], params["b0"], 4 * H,
                      tm_target=256, tn_target=512)
    g0 = g0.reshape(T, Bp, 4 * H)

    # Pre-broadcast layer-1 bias once (avoid re-broadcasting every loop iteration).
    b1b = jnp.broadcast_to(params["b1"], (Bp, 4 * H))

    # ---- serial recurrence: single-buffered, everything VMEM-resident, fori_loop over T ----
    recur_bytes = 4 * (T * Bp * 4 * H            # g0
                       + 3 * H * 4 * H           # whh0, wih1, whh1 (f32)
                       + Bp * 4 * H              # b1 (broadcast)
                       + T * Bp * H)             # h1 output slab
    vmem_limit = int(min(56 * 2**20, max(2 * recur_bytes, 32 * 2**20)))

    h1_tm = pl.pallas_call(
        _lstm_recurrent_kernel,
        out_shape=jax.ShapeDtypeStruct((T, Bp, H), jnp.float32),
        in_specs=[pl.BlockSpec(memory_space=pltpu.MemorySpace.VMEM) for _ in range(5)],
        out_specs=pl.BlockSpec(memory_space=pltpu.MemorySpace.VMEM),
        compiler_params=pltpu.CompilerParams(vmem_limit_bytes=vmem_limit),
    )(g0, params["whh0"], params["wih1"], params["whh1"], b1b)

    # ---- transpose the SMALL h1 tensor to batch-major (not the big logits) ----
    h1_bm = jnp.transpose(h1_tm, (1, 0, 2)).reshape(Bp * T, H)    # (Bp*T, H)

    # ---- hoisted vocab head: one big (Bp*T, H) x (H, Vp) matmul, single row tile ----
    logits = _matmul_bias(h1_bm, params["wout"], params["bout"], V,
                          tm_target=Bp * T, tn_target=1024)
    logits = logits.reshape(Bp, T, V)
    return logits[:B]                                             # (B, T, V), already batch-first


def init_params(key, vocab_size, embed_size, hidden_size):
    """Deterministic init. LSTM/linear weights ~ U(-1/sqrt(H), 1/sqrt(H)) like PyTorch.
    Hoisted-matmul weights are stored bf16 and pre-padded to lane multiples ONCE here,
    so the jitted forward never pads weights. Recurrence weights stay f32."""
    assert (4 * hidden_size) % 128 == 0, "4*H must be lane-aligned"
    ks = jax.random.split(key, 12)
    bound = 1.0 / jnp.sqrt(jnp.float32(hidden_size))
    u = lambda k, shape: jax.random.uniform(k, shape, jnp.float32, -bound, bound)

    vp = _round_up(vocab_size, 128)
    wout = u(ks[9], (hidden_size, vocab_size))
    bout = u(ks[10], (1, vocab_size))

    params = {
        # "pretrained" embedding table (synthetic, deterministic)
        "embedding": jax.random.normal(ks[0], (vocab_size, embed_size), jnp.float32),
        # layer 0 (PyTorch stores (4H, in); we pre-transpose to (in, 4H)); bf16 storage
        "wih0": u(ks[1], (embed_size, 4 * hidden_size)).astype(jnp.bfloat16),
        "whh0": u(ks[2], (hidden_size, 4 * hidden_size)),
        "b0":   u(ks[3], (1, 4 * hidden_size)) + u(ks[4], (1, 4 * hidden_size)),  # b_ih + b_hh
        # layer 1 (f32: recurrence precision)
        "wih1": u(ks[5], (hidden_size, 4 * hidden_size)),
        "whh1": u(ks[6], (hidden_size, 4 * hidden_size)),
        "b1":   u(ks[7], (1, 4 * hidden_size)) + u(ks[8], (1, 4 * hidden_size)),
        # linear head: bf16, pre-padded to a 128 multiple along vocab
        "wout": jnp.pad(wout, ((0, 0), (0, vp - vocab_size))).astype(jnp.bfloat16),
        "bout": jnp.pad(bout, ((0, 0), (0, vp - vocab_size))),
    }
    return params


def _reference_forward(features, captions, params):
    """Pure-JAX reference (lax.scan LSTM). Uses the same (bf16-rounded) hoisted-matmul
    weights as the kernel path so the only divergence is in-kernel bf16 activation casts."""
    V = params["embedding"].shape[0]
    wih0 = params["wih0"].astype(jnp.float32)
    wout = params["wout"][:, :V].astype(jnp.float32)
    bout = params["bout"][:, :V]

    emb = jnp.take(params["embedding"], captions, axis=0)
    x = jnp.concatenate([features[:, None, :], emb], 1)[:, :-1, :]   # (B, T, E)
    x = jnp.transpose(x, (1, 0, 2))                                  # (T, B, E)
    H = params["whh0"].shape[0]

    def cell(x_t, h, c, wih, whh, b):
        g = x_t @ wih + h @ whh + b
        i, f, gg, o = (jax.nn.sigmoid(g[:, :H]), jax.nn.sigmoid(g[:, H:2 * H]),
                       jnp.tanh(g[:, 2 * H:3 * H]), jax.nn.sigmoid(g[:, 3 * H:]))
        c = f * c + i * gg
        return o * jnp.tanh(c), c

    B = features.shape[0]
    init = (jnp.zeros((B, H)),) * 4

    def step(carry, x_t):
        h0, c0, h1, c1 = carry
        h0, c0 = cell(x_t, h0, c0, wih0, params["whh0"], params["b0"])
        h0, c0 = h0, c0
        h1, c1 = cell(h0, h1, c1, params["wih1"], params["whh1"], params["b1"])
        return (h0, c0, h1, c1), h1 @ wout + bout

    _, ys = jax.lax.scan(step, init, x)
    return jnp.transpose(ys, (1, 0, 2))


if __name__ == "__main__":
    # Small, TPU-friendly shapes (module defaults are embed=300, hidden=512).
    B, S = 2, 8              # batch, caption length
    E, H, V = 32, 128, 250   # embed, hidden, vocab (V not a 128 multiple -> exercises padding)

    key = jax.random.PRNGKey(0)
    k_par, k_feat, k_cap = jax.random.split(key, 3)

    params = init_params(k_par, V, E, H)
    features = jax.random.normal(k_feat, (B, E), jnp.float32)
    captions = jax.random.randint(k_cap, (B, S), 0, V, jnp.int32)

    out = decoder_rnn_forward(features, captions, params)
    out = jax.block_until_ready(out)
    assert out.shape == (B, S, V), out.shape

    ref = _reference_forward(features, captions, params)
    err = float(jnp.max(jnp.abs(out - ref)))
    # Tolerance loosened for bf16 operands in the two hoisted matmuls (f32 accumulation).
    assert jnp.allclose(out, ref, atol=2e-2, rtol=2e-2), err

    print("KERNEL_OK")
</pallas_src>

<mosaic_0001>
module attributes {stable_mosaic.version = 11 : i64} {
  func.func @_matmul_bias_kernel(%arg0: i32, %arg1: i32, %arg2: memref<64x32xf32, #tpu.memory_space<vmem>>, %arg3: memref<32x512xbf16, #tpu.memory_space<vmem>>, %arg4: memref<1x512xf32, #tpu.memory_space<vmem>>, %arg5: memref<64x512xf32, #tpu.memory_space<vmem>>) attributes {dimension_semantics = [#tpu.dimension_semantics<parallel>, #tpu.dimension_semantics<parallel>], iteration_bounds = array<i64: 1, 1>, scalar_prefetch = 0 : i64, scratch_operands = 0 : i64, tpu.core_type = #tpu.core_type<tc>, window_params = [{transform_indices = @transform_0, window_bounds = array<i64: 64, 32>}, {transform_indices = @transform_1, window_bounds = array<i64: 32, 512>}, {transform_indices = @transform_2, window_bounds = array<i64: 1, 512>}, {transform_indices = @transform_3, window_bounds = array<i64: 64, 512>}]} {
    %c0 = arith.constant 0 : index
    %c0_0 = arith.constant 0 : index
    %0 = vector.load %arg2[%c0, %c0_0] : memref<64x32xf32, #tpu.memory_space<vmem>>, vector<64x32xf32>
    %1 = arith.truncf %0 : vector<64x32xf32> to vector<64x32xbf16>
    %c0_1 = arith.constant 0 : index
    %c0_2 = arith.constant 0 : index
    %2 = vector.load %arg3[%c0_1, %c0_2] : memref<32x512xbf16, #tpu.memory_space<vmem>>, vector<32x512xbf16>
    %cst = arith.constant dense<0.000000e+00> : vector<64x512xf32>
    %3 = tpu.matmul %1, %2, %cst {dimension_numbers = #tpu.dot_dimension_numbers<[1], [0], [0], [1], [0, 0, 1, 1], [], []>} : vector<64x32xbf16>, vector<32x512xbf16>, vector<64x512xf32> -> vector<64x512xf32>
    %c0_3 = arith.constant 0 : index
    %c0_4 = arith.constant 0 : index
    %4 = vector.load %arg4[%c0_3, %c0_4] : memref<1x512xf32, #tpu.memory_space<vmem>>, vector<1x512xf32>
    %5 = vector.broadcast %4 : vector<1x512xf32> to vector<64x512xf32>
    %6 = arith.addf %3, %5 : vector<64x512xf32>
    %c0_5 = arith.constant 0 : index
    %c0_6 = arith.constant 0 : index
    %7 = vector.load %arg5[%c0_5, %c0_6] : memref<64x512xf32, #tpu.memory_space<vmem>>, vector<64x512xf32>
    tpu.vector_store %arg5[%c0_5, %c0_6], %6 {strides = array<i32>} : memref<64x512xf32, #tpu.memory_space<vmem>>, vector<64x512xf32>,
    return
  }
  func.func @transform_0(%arg0: i32, %arg1: i32) -> (i32, i32) {
    %c0_i32 = arith.constant 0 : i32
    %c0_i32_0 = arith.constant 0 : i32
    return %arg0, %c0_i32 : i32, i32
  }
  func.func @transform_1(%arg0: i32, %arg1: i32) -> (i32, i32) {
    %c0_i32 = arith.constant 0 : i32
    %c0_i32_0 = arith.constant 0 : i32
    return %c0_i32, %arg1 : i32, i32
  }
  func.func @transform_2(%arg0: i32, %arg1: i32) -> (i32, i32) {
    %c0_i32 = arith.constant 0 : i32
    %c0_i32_0 = arith.constant 0 : i32
    return %c0_i32, %arg1 : i32, i32
  }
  func.func @transform_3(%arg0: i32, %arg1: i32) -> (i32, i32) {
    %c0_i32 = arith.constant 0 : i32
    return %arg0, %arg1 : i32, i32
  }
}

module attributes {stable_mosaic.version = 11 : i64} {
  func.func @_matmul_bias_kernel(%arg0: i32, %arg1: i32, %arg2: memref<64x128xf32, #tpu.memory_space<vmem>>, %arg3: memref<128x256xbf16, #tpu.memory_space<vmem>>, %arg4: memref<1x256xf32, #tpu.memory_space<vmem>>, %arg5: memref<64x256xf32, #tpu.memory_space<vmem>>) attributes {dimension_semantics = [#tpu.dimension_semantics<parallel>, #tpu.dimension_semantics<parallel>], iteration_bounds = array<i64: 1, 1>, scalar_prefetch = 0 : i64, scratch_operands = 0 : i64, tpu.core_type = #tpu.core_type<tc>, window_params = [{transform_indices = @transform_0, window_bounds = array<i64: 64, 128>}, {transform_indices = @transform_1, window_bounds = array<i64: 128, 256>}, {transform_indices = @transform_2, window_bounds = array<i64: 1, 256>}, {transform_indices = @transform_3, window_bounds = array<i64: 64, 256>}]} {
    %c0 = arith.constant 0 : index
    %c0_0 = arith.constant 0 : index
    %0 = vector.load %arg2[%c0, %c0_0] : memref<64x128xf32, #tpu.memory_space<vmem>>, vector<64x128xf32>
    %1 = arith.truncf %0 : vector<64x128xf32> to vector<64x128xbf16>
    %c0_1 = arith.constant 0 : index
    %c0_2 = arith.constant 0 : index
    %2 = vector.load %arg3[%c0_1, %c0_2] : memref<128x256xbf16, #tpu.memory_space<vmem>>, vector<128x256xbf16>
    %cst = arith.constant dense<0.000000e+00> : vector<64x256xf32>
    %3 = tpu.matmul %1, %2, %cst {dimension_numbers = #tpu.dot_dimension_numbers<[1], [0], [0], [1], [0, 0, 1, 1], [], []>} : vector<64x128xbf16>, vector<128x256xbf16>, vector<64x256xf32> -> vector<64x256xf32>
    %c0_3 = arith.constant 0 : index
    %c0_4 = arith.constant 0 : index
    %4 = vector.load %arg4[%c0_3, %c0_4] : memref<1x256xf32, #tpu.memory_space<vmem>>, vector<1x256xf32>
    %5 = vector.broadcast %4 : vector<1x256xf32> to vector<64x256xf32>
    %6 = arith.addf %3, %5 : vector<64x256xf32>
    %c0_5 = arith.constant 0 : index
    %c0_6 = arith.constant 0 : index
    %7 = vector.load %arg5[%c0_5, %c0_6] : memref<64x256xf32, #tpu.memory_space<vmem>>, vector<64x256xf32>
    tpu.vector_store %arg5[%c0_5, %c0_6], %6 {strides = array<i32>} : memref<64x256xf32, #tpu.memory_space<vmem>>, vector<64x256xf32>,
    return
  }
  func.func @transform_0(%arg0: i32, %arg1: i32) -> (i32, i32) {
    %c0_i32 = arith.constant 0 : i32
    %c0_i32_0 = arith.constant 0 : i32
    return %arg0, %c0_i32 : i32, i32
  }
  func.func @transform_1(%arg0: i32, %arg1: i32) -> (i32, i32) {
    %c0_i32 = arith.constant 0 : i32
    %c0_i32_0 = arith.constant 0 : i32
    return %c0_i32, %arg1 : i32, i32
  }
  func.func @transform_2(%arg0: i32, %arg1: i32) -> (i32, i32) {
    %c0_i32 = arith.constant 0 : i32
    %c0_i32_0 = arith.constant 0 : i32
    return %c0_i32, %arg1 : i32, i32
  }
  func.func @transform_3(%arg0: i32, %arg1: i32) -> (i32, i32) {
    %c0_i32 = arith.constant 0 : i32
    return %arg0, %arg1 : i32, i32
  }
}

module attributes {stable_mosaic.version = 11 : i64} {
  func.func @_lstm_recurrent_kernel(%arg0: memref<8x8x512xf32, #tpu.memory_space<vmem>>, %arg1: memref<128x512xf32, #tpu.memory_space<vmem>>, %arg2: memref<128x512xf32, #tpu.memory_space<vmem>>, %arg3: memref<128x512xf32, #tpu.memory_space<vmem>>, %arg4: memref<8x512xf32, #tpu.memory_space<vmem>>, %arg5: memref<8x8x128xf32, #tpu.memory_space<vmem>>) attributes {dimension_semantics = [], scalar_prefetch = 0 : i64, scratch_operands = 0 : i64, tpu.core_type = #tpu.core_type<tc>} {
    %cst = arith.constant 0.000000e+00 : f32
    %0 = vector.broadcast %cst : f32 to vector<8x128xf32>
    %c0_i32 = arith.constant 0 : i32
    %c8_i32 = arith.constant 8 : i32
    %1 = arith.addi %c0_i32, %c8_i32 : i32
    %c1_i32 = arith.constant 1 : i32
    %2:4 = scf.for %arg6 = %c0_i32 to %1 step %c1_i32 iter_args(%arg7 = %0, %arg8 = %0, %arg9 = %0, %arg10 = %0) -> (vector<8x128xf32>, vector<8x128xf32>, vector<8x128xf32>, vector<8x128xf32>)  : i32 {
      %3 = arith.index_cast %arg6 : i32 to index
      %c0 = arith.constant 0 : index
      %c0_1 = arith.constant 0 : index
      %4 = vector.load %arg0[%3, %c0, %c0_1] : memref<8x8x512xf32, #tpu.memory_space<vmem>>, vector<1x8x512xf32>
      %5 = vector.shape_cast %4 : vector<1x8x512xf32> to vector<8x512xf32>
      %c0_2 = arith.constant 0 : index
      %c0_3 = arith.constant 0 : index
      %6 = vector.load %arg1[%c0_2, %c0_3] : memref<128x512xf32, #tpu.memory_space<vmem>>, vector<128x512xf32>
      %cst_4 = arith.constant dense<0.000000e+00> : vector<8x512xf32>
      %7 = tpu.matmul %arg7, %6, %cst_4 {dimension_numbers = #tpu.dot_dimension_numbers<[1], [0], [0], [1], [0, 0, 1, 1], [], []>} : vector<8x128xf32>, vector<128x512xf32>, vector<8x512xf32> -> vector<8x512xf32>
      %8 = arith.addf %5, %7 : vector<8x512xf32>
      %9 = vector.extract_strided_slice %8 {offsets = [0, 0], sizes = [8, 128], strides = [1, 1]} : vector<8x512xf32> to vector<8x128xf32>
      %10 = arith.negf %9 : vector<8x128xf32>
      %11 = math.exp %10 : vector<8x128xf32>
      %cst_5 = arith.constant 1.000000e+00 : f32
      %12 = vector.broadcast %cst_5 : f32 to vector<8x128xf32>
      %13 = arith.addf %12, %11 : vector<8x128xf32>
      %14 = arith.divf %12, %13 : vector<8x128xf32>
      %15 = vector.extract_strided_slice %8 {offsets = [0, 128], sizes = [8, 128], strides = [1, 1]} : vector<8x512xf32> to vector<8x128xf32>
      %16 = arith.negf %15 : vector<8x128xf32>
      %17 = math.exp %16 : vector<8x128xf32>
      %cst_6 = arith.constant 1.000000e+00 : f32
      %18 = vector.broadcast %cst_6 : f32 to vector<8x128xf32>
      %19 = arith.addf %18, %17 : vector<8x128xf32>
      %20 = arith.divf %18, %19 : vector<8x128xf32>
      %21 = vector.extract_strided_slice %8 {offsets = [0, 256], sizes = [8, 128], strides = [1, 1]} : vector<8x512xf32> to vector<8x128xf32>
      %22 = math.tanh %21 : vector<8x128xf32>
      %23 = vector.extract_strided_slice %8 {offsets = [0, 384], sizes = [8, 128], strides = [1, 1]} : vector<8x512xf32> to vector<8x128xf32>
      %24 = arith.negf %23 : vector<8x128xf32>
      %25 = math.exp %24 : vector<8x128xf32>
      %cst_7 = arith.constant 1.000000e+00 : f32
      %26 = vector.broadcast %cst_7 : f32 to vector<8x128xf32>
      %27 = arith.addf %26, %25 : vector<8x128xf32>
      %28 = arith.divf %26, %27 : vector<8x128xf32>
      %29 = arith.mulf %20, %arg8 : vector<8x128xf32>
      %30 = arith.mulf %14, %22 : vector<8x128xf32>
      %31 = arith.addf %29, %30 : vector<8x128xf32>
      %32 = math.tanh %31 : vector<8x128xf32>
      %33 = arith.mulf %28, %32 : vector<8x128xf32>
      %c0_8 = arith.constant 0 : index
      %c0_9 = arith.constant 0 : index
      %34 = vector.load %arg2[%c0_8, %c0_9] : memref<128x512xf32, #tpu.memory_space<vmem>>, vector<128x512xf32>
      %cst_10 = arith.constant dense<0.000000e+00> : vector<8x512xf32>
      %35 = tpu.matmul %33, %34, %cst_10 {dimension_numbers = #tpu.dot_dimension_numbers<[1], [0], [0], [1], [0, 0, 1, 1], [], []>} : vector<8x128xf32>, vector<128x512xf32>, vector<8x512xf32> -> vector<8x512xf32>
      %c0_11 = arith.constant 0 : index
      %c0_12 = arith.constant 0 : index
      %36 = vector.load %arg3[%c0_11, %c0_12] : memref<128x512xf32, #tpu.memory_space<vmem>>, vector<128x512xf32>
      %cst_13 = arith.constant dense<0.000000e+00> : vector<8x512xf32>
      %37 = tpu.matmul %arg9, %36, %cst_13 {dimension_numbers = #tpu.dot_dimension_numbers<[1], [0], [0], [1], [0, 0, 1, 1], [], []>} : vector<8x128xf32>, vector<128x512xf32>, vector<8x512xf32> -> vector<8x512xf32>
      %38 = arith.addf %35, %37 : vector<8x512xf32>
      %c0_14 = arith.constant 0 : index
      %c0_15 = arith.constant 0 : index
      %39 = vector.load %arg4[%c0_14, %c0_15] : memref<8x512xf32, #tpu.memory_space<vmem>>, vector<8x512xf32>
      %40 = arith.addf %38, %39 : vector<8x512xf32>
      %41 = vector.extract_strided_slice %40 {offsets = [0, 0], sizes = [8, 128], strides = [1, 1]} : vector<8x512xf32> to vector<8x128xf32>
      %42 = arith.negf %41 : vector<8x128xf32>
      %43 = math.exp %42 : vector<8x128xf32>
      %cst_16 = arith.constant 1.000000e+00 : f32
      %44 = vector.broadcast %cst_16 : f32 to vector<8x128xf32>
      %45 = arith.addf %44, %43 : vector<8x128xf32>
      %46 = arith.divf %44, %45 : vector<8x128xf32>
      %47 = vector.extract_strided_slice %40 {offsets = [0, 128], sizes = [8, 128], strides = [1, 1]} : vector<8x512xf32> to vector<8x128xf32>
      %48 = arith.negf %47 : vector<8x128xf32>
      %49 = math.exp %48 : vector<8x128xf32>
      %cst_17 = arith.constant 1.000000e+00 : f32
      %50 = vector.broadcast %cst_17 : f32 to vector<8x128xf32>
      %51 = arith.addf %50, %49 : vector<8x128xf32>
      %52 = arith.divf %50, %51 : vector<8x128xf32>
      %53 = vector.extract_strided_slice %40 {offsets = [0, 256], sizes = [8, 128], strides = [1, 1]} : vector<8x512xf32> to vector<8x128xf32>
      %54 = math.tanh %53 : vector<8x128xf32>
      %55 = vector.extract_strided_slice %40 {offsets = [0, 384], sizes = [8, 128], strides = [1, 1]} : vector<8x512xf32> to vector<8x128xf32>
      %56 = arith.negf %55 : vector<8x128xf32>
      %57 = math.exp %56 : vector<8x128xf32>
      %cst_18 = arith.constant 1.000000e+00 : f32
      %58 = vector.broadcast %cst_18 : f32 to vector<8x128xf32>
      %59 = arith.addf %58, %57 : vector<8x128xf32>
      %60 = arith.divf %58, %59 : vector<8x128xf32>
      %61 = arith.mulf %52, %arg10 : vector<8x128xf32>
      %62 = arith.mulf %46, %54 : vector<8x128xf32>
      %63 = arith.addf %61, %62 : vector<8x128xf32>
      %64 = math.tanh %63 : vector<8x128xf32>
      %65 = arith.mulf %60, %64 : vector<8x128xf32>
      %66 = arith.index_cast %arg6 : i32 to index
      %c0_19 = arith.constant 0 : index
      %c0_20 = arith.constant 0 : index
      %67 = vector.load %arg5[%66, %c0_19, %c0_20] : memref<8x8x128xf32, #tpu.memory_space<vmem>>, vector<1x8x128xf32>
      %68 = vector.shape_cast %67 : vector<1x8x128xf32> to vector<8x128xf32>
      %69 = vector.shape_cast %65 : vector<8x128xf32> to vector<1x8x128xf32>
      tpu.vector_store %arg5[%66, %c0_19, %c0_20], %69 {strides = array<i32>} : memref<8x8x128xf32, #tpu.memory_space<vmem>>, vector<1x8x128xf32>,
      scf.yield %33, %31, %65, %63 : vector<8x128xf32>, vector<8x128xf32>, vector<8x128xf32>, vector<8x128xf32>
    }
    %c8_i32_0 = arith.constant 8 : i32
    return
  }
}

</mosaic_0001>

<llo_original>
// kernel: decoder_rnn_forward.5
$region0: #{decoder_rnn_forward.5}
  #allocation0 [shape = 'u32[]', space=smem, size = 0x4, offset = 0x4, fixed_abs, tag = 'smem constant byte address 0x4 - core index']
  #allocation1 [shape = 'u32[144,128]{1,0:T(1,128)}', space=vmem, size = 0x12000, scoped, tag = 'internal scratch']
  %s0 = inlined_call_operand.vmem [shape: f32[64,128], index: 0, kind: input, shape index: {}]
  %s1 = inlined_call_operand.vmem [shape: bf16[128,256], index: 1, kind: input, shape index: {}]
  %s2 = inlined_call_operand.vmem [shape: f32[1,256], index: 2, kind: input, shape index: {}]
  %s3 = inlined_call_operand.vmem [shape: f32[64,256], index: 3, kind: output, shape index: {}]
  %s4 = sld [smem:[#allocation0]]
  $region22: #{decoder_rnn_forward.5} parent=0
    _
  %s6 = ssub.s32 1, %s4
  %s7 = scalar_select 0, %s6, %s4
  // Predicated region
  $region2: #{decoder_rnn_forward.5} parent=0 // pred_check
    _
  $region3: #{decoder_rnn_forward.5} parent=0 // pred_check_branch
    %9 = sbr.rel (0) target = $region5
  $region4: #{decoder_rnn_forward.5} parent=0 // pred_region
    _
  $region5: #{decoder_rnn_forward.5} parent=0 // pred_fallthru
    _
  // Predicated region
  $region6: #{decoder_rnn_forward.5} parent=0 // pred_check
    _
  $region7: #{decoder_rnn_forward.5} parent=0 // pred_check_branch
    %11 = sbr.rel (0) target = $region9
  $region8: #{decoder_rnn_forward.5} parent=0 // pred_region
    _
  $region9: #{decoder_rnn_forward.5} parent=0 // pred_fallthru
    _
  // Predicated region
  $region10: #{decoder_rnn_forward.5} parent=0 // pred_check
    _
  $region11: #{decoder_rnn_forward.5} parent=0 // pred_check_branch
    %13 = sbr.rel (0) target = $region13
  $region12: #{decoder_rnn_forward.5} parent=0 // pred_region
    _
  $region13: #{decoder_rnn_forward.5} parent=0 // pred_fallthru
    _
  %v15 = vld [vmem:[%s0] sm:$0xff]
  %v16 = vld [vmem:[%s0 + $0x8] sm:$0xff]
  %v17 = vld [vmem:[%s0 + $0x10] sm:$0xff]
  %v18 = vld [vmem:[%s0 + $0x18] sm:$0xff]
  %v19 = vld [vmem:[%s0 + $0x20] sm:$0xff]
  %v20 = vld [vmem:[%s0 + $0x28] sm:$0xff]
  %v21 = vld [vmem:[%s0 + $0x30] sm:$0xff]
  %v22 = vld [vmem:[%s0 + $0x38] sm:$0xff]
  %v23 = vpack.c.bf16 %v16, %v15
  %v24 = vpack.c.bf16 %v18, %v17
  %v25 = vpack.c.bf16 %v20, %v19
  %v26 = vpack.c.bf16 %v22, %v21
  %v27 = vld [vmem:[%s1] sm:$0xff]
  %v28 = vld [vmem:[%s1 + $0x8] sm:$0xff]
  %v29 = vld [vmem:[%s1 + $0x10] sm:$0xff]
  %v30 = vld [vmem:[%s1 + $0x18] sm:$0xff]
  %v31 = vld [vmem:[%s1 + $0x20] sm:$0xff]
  %v32 = vld [vmem:[%s1 + $0x28] sm:$0xff]
  %v33 = vld [vmem:[%s1 + $0x30] sm:$0xff]
  %v34 = vld [vmem:[%s1 + $0x38] sm:$0xff]
  %v35 = vld [vmem:[%s1 + $0x40] sm:$0xff]
  %v36 = vld [vmem:[%s1 + $0x48] sm:$0xff]
  %v37 = vld [vmem:[%s1 + $0x50] sm:$0xff]
  %v38 = vld [vmem:[%s1 + $0x58] sm:$0xff]
  %v39 = vld [vmem:[%s1 + $0x60] sm:$0xff]
  %v40 = vld [vmem:[%s1 + $0x68] sm:$0xff]
  %v41 = vld [vmem:[%s1 + $0x70] sm:$0xff]
  %v42 = vld [vmem:[%s1 + $0x78] sm:$0xff]
  %v43 = vld [vmem:[%s2] sm:$0x3]
  %v45 = vlaneseq
  %v46 = vshrl.u32 %v45, 7
  %v47 = vsub.s32 0, %v46
  %v48 = vrot.slane %v43, %v47
  %v49 = vlaneseq
  %v50 = vshrl.u32 %v49, 7
  %v51 = vsub.s32 1, %v50
  %v52 = vrot.slane %v43, %v51
  %v71 = vunpack.c.l.b16 %v27
  %v72 = vunpack.c.h.b16 %v27
  %v73 = vunpack.c.l.b16 %v28
  %v74 = vunpack.c.h.b16 %v28
  %v75 = vunpack.c.l.b16 %v29
  %v76 = vunpack.c.h.b16 %v29
  %v77 = vunpack.c.l.b16 %v30
  %v78 = vunpack.c.h.b16 %v30
  %v79 = vunpack.c.l.b16 %v31
  %v80 = vunpack.c.h.b16 %v31
  %v81 = vunpack.c.l.b16 %v32
  %v82 = vunpack.c.h.b16 %v32
  %v83 = vunpack.c.l.b16 %v33
  %v84 = vunpack.c.h.b16 %v33
  %v85 = vunpack.c.l.b16 %v34
  %v86 = vunpack.c.h.b16 %v34
  %v87 = vunpack.c.l.b16 %v35
  %v88 = vunpack.c.h.b16 %v35
  %v89 = vunpack.c.l.b16 %v36
  %v90 = vunpack.c.h.b16 %v36
  %v91 = vunpack.c.l.b16 %v37
  %v92 = vunpack.c.h.b16 %v37
  %v93 = vunpack.c.l.b16 %v38
  %v94 = vunpack.c.h.b16 %v38
  %v95 = vunpack.c.l.b16 %v39
  %v96 = vunpack.c.h.b16 %v39
  %v97 = vunpack.c.l.b16 %v40
  %v98 = vunpack.c.h.b16 %v40
  %v99 = vunpack.c.l.b16 %v41
  %v100 = vunpack.c.h.b16 %v41
  %v101 = vunpack.c.l.b16 %v42
  %v102 = vunpack.c.h.b16 %v42
  %v103 = vpack.c.b16 %v73, %v71
  %v104 = vpack.c.b16 %v74, %v72
  %v105 = vpack.c.b16 %v77, %v75
  %v106 = vpack.c.b16 %v78, %v76
  %v107 = vpack.c.b16 %v81, %v79
  %v108 = vpack.c.b16 %v82, %v80
  %v109 = vpack.c.b16 %v85, %v83
  %v110 = vpack.c.b16 %v86, %v84
  %v111 = vpack.c.b16 %v89, %v87
  %v112 = vpack.c.b16 %v90, %v88
  %v113 = vpack.c.b16 %v93, %v91
  %v114 = vpack.c.b16 %v94, %v92
  %v115 = vpack.c.b16 %v97, %v95
  %v116 = vpack.c.b16 %v98, %v96
  %v117 = vpack.c.b16 %v101, %v99
  %v118 = vpack.c.b16 %v102, %v100
  %135 = vmatprep.subr.bf16.mxu0 %v118
  %136 = vmatpush1.bf16.msra.mxu0 %v117
  %137 = vmatprep.subr.bf16.mxu0 %v116
  %138 = vmatpush1.bf16.msra.mxu0 %v115
  %139 = vmatprep.subr.bf16.mxu0 %v114
  %140 = vmatpush1.bf16.msra.mxu0 %v113
  %141 = vmatprep.subr.bf16.mxu0 %v112
  %142 = vmatpush1.bf16.msra.mxu0 %v111
  %143 = vmatprep.subr.bf16.mxu0 %v110
  %144 = vmatpush1.bf16.msra.mxu0 %v109
  %145 = vmatprep.subr.bf16.mxu0 %v108
  %146 = vmatpush1.bf16.msra.mxu0 %v107
  %147 = vmatprep.subr.bf16.mxu0 %v106
  %148 = vmatpush1.bf16.msra.mxu0 %v105
  %149 = vmatprep.subr.bf16.mxu0 %v104
  %150 = vmatpush1.bf16.msra.mxu0 %v103
  %151 = vmatprep.subr.bf16.mxu0 0
  %152 = vmatpush2.bf16.msra.mxu0 0
  %153 = vmatprep.subr.bf16.mxu0 0
  %154 = vmatpush2.bf16.msra.mxu0 0
  %155 = vmatprep.subr.bf16.mxu0 0
  %156 = vmatpush2.bf16.msra.mxu0 0
  %157 = vmatprep.subr.bf16.mxu0 0
  %158 = vmatpush2.bf16.msra.mxu0 0
  %159 = vmatprep.subr.bf16.mxu0 0
  %160 = vmatpush2.bf16.msra.mxu0 0
  %161 = vmatprep.subr.bf16.mxu0 0
  %162 = vmatpush2.bf16.msra.mxu0 0
  %163 = vmatprep.subr.bf16.mxu0 0
  %164 = vmatpush2.bf16.msra.mxu0 0
  %165 = vmatprep.subr.bf16.mxu0 0
  %166 = vmatpush2.bf16.msra.mxu0 0
  %167 = vmatprep.mubr.bf16.mxu0 0
  %168 = vmatmul.mubr.bf16.gmra.mxu0 %v23
  %v169 = vpop.f32.mrf.mxu0
  %v170 = vadd.f32 %v48, %v169
  %v171 = vpop.f32.mrf.mxu0
  %v172 = vadd.f32 %v52, %v171
  %v173 = vpop.f32.mrf.mxu0
  %v174 = vadd.f32 %v48, %v173
  %v175 = vpop.f32.mrf.mxu0
  %v176 = vadd.f32 %v52, %v175
  %177 = vmatprep.mubr.bf16.mxu0 0
  %178 = vmatmul.mubr.bf16.gmra.mxu0 %v24
  %v179 = vpop.f32.mrf.mxu0
  %v180 = vadd.f32 %v48, %v179
  %v181 = vpop.f32.mrf.mxu0
  %v182 = vadd.f32 %v52, %v181
  %v183 = vpop.f32.mrf.mxu0
  %v184 = vadd.f32 %v48, %v183
  %v185 = vpop.f32.mrf.mxu0
  %v186 = vadd.f32 %v52, %v185
  %187 = vmatprep.mubr.bf16.mxu0 0
  %188 = vmatmul.mubr.bf16.gmra.mxu0 %v25
  %v189 = vpop.f32.mrf.mxu0
  %v190 = vadd.f32 %v48, %v189
  %v191 = vpop.f32.mrf.mxu0
  %v192 = vadd.f32 %v52, %v191
  %v193 = vpop.f32.mrf.mxu0
  %v194 = vadd.f32 %v48, %v193
  %v195 = vpop.f32.mrf.mxu0
  %v196 = vadd.f32 %v52, %v195
  %197 = vmatprep.mubr.bf16.mxu0 0
  %198 = vmatmul.mubr.bf16.gmra.mxu0 %v26
  %v199 = vpop.f32.mrf.mxu0
  %v200 = vadd.f32 %v48, %v199
  %v201 = vpop.f32.mrf.mxu0
  %v202 = vadd.f32 %v52, %v201
  %v203 = vpop.f32.mrf.mxu0
  %v204 = vadd.f32 %v48, %v203
  %v205 = vpop.f32.mrf.mxu0
  %v206 = vadd.f32 %v52, %v205
  %207 = vdwg.mxu0
  %208 = vst [vmem:[%s3] sm:$0xff] %v170
  %209 = vst [vmem:[%s3 + $0x8] sm:$0xff] %v172
  %210 = vst [vmem:[%s3 + $0x10] sm:$0xff] %v174
  %211 = vst [vmem:[%s3 + $0x18] sm:$0xff] %v176
  %212 = vst [vmem:[%s3 + $0x20] sm:$0xff] %v180
  %213 = vst [vmem:[%s3 + $0x28] sm:$0xff] %v182
  %214 = vst [vmem:[%s3 + $0x30] sm:$0xff] %v184
  %215 = vst [vmem:[%s3 + $0x38] sm:$0xff] %v186
  %216 = vst [vmem:[%s3 + $0x40] sm:$0xff] %v190
  %217 = vst [vmem:[%s3 + $0x48] sm:$0xff] %v192
  %218 = vst [vmem:[%s3 + $0x50] sm:$0xff] %v194
  %219 = vst [vmem:[%s3 + $0x58] sm:$0xff] %v196
  %220 = vst [vmem:[%s3 + $0x60] sm:$0xff] %v200
  %221 = vst [vmem:[%s3 + $0x68] sm:$0xff] %v202
  %222 = vst [vmem:[%s3 + $0x70] sm:$0xff] %v204
  %223 = vst [vmem:[%s3 + $0x78] sm:$0xff] %v206
  // Predicated region
  $region14: #{decoder_rnn_forward.5} parent=0 // pred_check
    _
  $region15: #{decoder_rnn_forward.5} parent=0 // pred_check_branch
    %225 = sbr.rel (0) target = $region17
  $region16: #{decoder_rnn_forward.5} parent=0 // pred_region
    _
  $region17: #{decoder_rnn_forward.5} parent=0 // pred_fallthru
    _
  // Predicated region
  $region18: #{decoder_rnn_forward.5} parent=0 // pred_check
    _
  $region19: #{decoder_rnn_forward.5} parent=0 // pred_check_branch
    %227 = sbr.rel (0) target = $region21
  $region20: #{decoder_rnn_forward.5} parent=0 // pred_region
    _
  $region21: #{decoder_rnn_forward.5} parent=0 // pred_fallthru
    _

// kernel: decoder_rnn_forward.3
$region0: #{decoder_rnn_forward.3}
  #allocation0 [shape = 'u32[]', space=smem, size = 0x4, offset = 0x4, fixed_abs, tag = 'smem constant byte address 0x4 - core index']
  #allocation1 [shape = 'u32[144,128]{1,0:T(1,128)}', space=vmem, size = 0x12000, scoped, tag = 'internal scratch']
  %s0 = inlined_call_operand.vmem [shape: f32[64,32], index: 0, kind: input, shape index: {}]
  %s1 = inlined_call_operand.hbm [shape: bf16[32,512], index: 1, kind: input, shape index: {}]
  %s2 = inlined_call_operand.vmem [shape: f32[1,512], index: 2, kind: input, shape index: {}]
  %s3 = inlined_call_operand.vmem [shape: f32[64,512], index: 3, kind: output, shape index: {}]
  %s4 = sld [smem:[#allocation0]]
  $region26: #{decoder_rnn_forward.3} parent=0
    _
  %s6 = ssub.s32 1, %s4
  %s7 = scalar_select 0, %s6, %s4
  $region1: #{decoder_rnn_forward.3} parent=0
    #allocation2 [shape = 'u8[32768]{0}', space=vmem, size = 0x8000, scoped, tag = 'input window, operand 1, single buffered']
    #allocation3 [shape = 's32[1]{0}', space=sflag, size = 0x4, scoped, tag = 'scoped memory for decoder_rnn_forward.3']
    %8 = vsyncpa [#allocation3], 0
    // Predicated region
    $region2: #{decoder_rnn_forward.3} parent=1 // pred_check
      _
    $region3: #{decoder_rnn_forward.3} parent=1 // pred_check_branch
      %10 = sbr.rel (0) target = $region5
    $region4: #{decoder_rnn_forward.3} parent=1 // pred_region
      _
    $region5: #{decoder_rnn_forward.3} parent=1 // pred_fallthru
      _
    // Predicated region
    $region6: #{decoder_rnn_forward.3} parent=1 // pred_check
      _
    $region7: #{decoder_rnn_forward.3} parent=1 // pred_check_branch
      %12 = sbr.rel (0) target = $region9
    $region8: #{decoder_rnn_forward.3} parent=1 // pred_region
      %s14 = ssub.s32 1024, 1024
      %15 = vsyncadd [#allocation3], %s14
      %s16 = sshll.u32 [#allocation2], 4
      %s17 = int_to_ptr.vmem [resolvable:$true] %s16
      %22 = dma.hbm_to_vmem [thread:$0]  %s1, 1024, %s17, [#allocation3], 256, 256, 16
    $region9: #{decoder_rnn_forward.3} parent=1 // pred_fallthru
      _
    // Predicated region
    $region10: #{decoder_rnn_forward.3} parent=1 // pred_check
      _
    $region11: #{decoder_rnn_forward.3} parent=1 // pred_check_branch
      %24 = sbr.rel (0) target = $region13
    $region12: #{decoder_rnn_forward.3} parent=1 // pred_region
      _
    $region13: #{decoder_rnn_forward.3} parent=1 // pred_fallthru
      _
    // Predicated region
    $region14: #{decoder_rnn_forward.3} parent=1 // pred_check
      _
    $region15: #{decoder_rnn_forward.3} parent=1 // pred_check_branch
      %26 = sbr.rel (0) target = $region17
    $region16: #{decoder_rnn_forward.3} parent=1 // pred_region
      %27 = dma.done [#allocation3], 1024
    $region17: #{decoder_rnn_forward.3} parent=1 // pred_fallthru
      _
    %v29 = vld [vmem:[%s0] sm:$0xff]
    %v30 = vld [vmem:[%s0 + $0x8] sm:$0xff]
    %v31 = vld [vmem:[%s0 + $0x10] sm:$0xff]
    %v32 = vld [vmem:[%s0 + $0x18] sm:$0xff]
    %v33 = vld [vmem:[%s0 + $0x20] sm:$0xff]
    %v34 = vld [vmem:[%s0 + $0x28] sm:$0xff]
    %v35 = vld [vmem:[%s0 + $0x30] sm:$0xff]
    %v36 = vld [vmem:[%s0 + $0x38] sm:$0xff]
    %v37 = vpack.c.bf16 %v30, %v29
    %v38 = vpack.c.bf16 %v32, %v31
    %v39 = vpack.c.bf16 %v34, %v33
    %v40 = vpack.c.bf16 %v36, %v35
    %v41 = vld [vmem:[#allocation2] sm:$0xff]
    %v42 = vld [vmem:[#allocation2 + $0x8] sm:$0xff]
    %v43 = vld [vmem:[#allocation2 + $0x10] sm:$0xff]
    %v44 = vld [vmem:[#allocation2 + $0x18] sm:$0xff]
    %v45 = vld [vmem:[#allocation2 + $0x20] sm:$0xff]
    %v46 = vld [vmem:[#allocation2 + $0x28] sm:$0xff]
    %v47 = vld [vmem:[#allocation2 + $0x30] sm:$0xff]
    %v48 = vld [vmem:[#allocation2 + $0x38] sm:$0xff]
    %v49 = vld [vmem:[%s2] sm:$0xf]
    %v51 = vlaneseq
    %v52 = vshrl.u32 %v51, 7
    %v53 = vsub.s32 0, %v52
    %v54 = vrot.slane %v49, %v53
    %v55 = vlaneseq
    %v56 = vshrl.u32 %v55, 7
    %v57 = vsub.s32 1, %v56
    %v58 = vrot.slane %v49, %v57
    %v59 = vlaneseq
    %v60 = vshrl.u32 %v59, 7
    %v61 = vsub.s32 2, %v60
    %v62 = vrot.slane %v49, %v61
    %v63 = vlaneseq
    %v64 = vshrl.u32 %v63, 7
    %v65 = vsub.s32 3, %v64
    %v66 = vrot.slane %v49, %v65
    %v79 = vunpack.c.l.b16 %v41
    %v80 = vunpack.c.h.b16 %v41
    %v81 = vunpack.c.l.b16 %v42
    %v82 = vunpack.c.h.b16 %v42
    %v83 = vunpack.c.l.b16 %v43
    %v84 = vunpack.c.h.b16 %v43
    %v85 = vunpack.c.l.b16 %v44
    %v86 = vunpack.c.h.b16 %v44
    %v87 = vunpack.c.l.b16 %v45
    %v88 = vunpack.c.h.b16 %v45
    %v89 = vunpack.c.l.b16 %v46
    %v90 = vunpack.c.h.b16 %v46
    %v91 = vunpack.c.l.b16 %v47
    %v92 = vunpack.c.h.b16 %v47
    %v93 = vunpack.c.l.b16 %v48
    %v94 = vunpack.c.h.b16 %v48
    %v95 = vpack.c.b16 %v83, %v79
    %v96 = vpack.c.b16 %v84, %v80
    %v97 = vpack.c.b16 %v85, %v81
    %v98 = vpack.c.b16 %v86, %v82
    %v99 = vpack.c.b16 %v91, %v87
    %v100 = vpack.c.b16 %v92, %v88
    %v101 = vpack.c.b16 %v93, %v89
    %v102 = vpack.c.b16 %v94, %v90
    %vm111 = vcmask 261120
    %v113 = vsel %vm111, %v37, 0
    %v116 = vsel %vm111, %v38, 0
    %v119 = vsel %vm111, %v39, 0
    %v122 = vsel %vm111, %v40, 0
    %124 = vmatprep.subr.bf16.mxu0 0
    %125 = vmatpush1.bf16.msra.mxu0 0
    %126 = vmatprep.subr.bf16.mxu0 0
    %127 = vmatpush1.bf16.msra.mxu0 0
    %128 = vmatprep.subr.bf16.mxu0 0
    %129 = vmatpush1.bf16.msra.mxu0 0
    %130 = vmatprep.subr.bf16.mxu0 0
    %131 = vmatpush1.bf16.msra.mxu0 0
    %132 = vmatprep.subr.bf16.mxu0 0
    %133 = vmatpush1.bf16.msra.mxu0 0
    %134 = vmatprep.subr.bf16.mxu0 0
    %135 = vmatpush1.bf16.msra.mxu0 0
    %136 = vmatprep.subr.bf16.mxu0 %v100
    %137 = vmatpush1.bf16.msra.mxu0 %v99
    %138 = vmatprep.subr.bf16.mxu0 %v96
    %139 = vmatpush1.bf16.msra.mxu0 %v95
    %140 = vmatprep.subr.bf16.mxu0 0
    %141 = vmatpush2.bf16.msra.mxu0 0
    %142 = vmatprep.subr.bf16.mxu0 0
    %143 = vmatpush2.bf16.msra.mxu0 0
    %144 = vmatprep.subr.bf16.mxu0 0
    %145 = vmatpush2.bf16.msra.mxu0 0
    %146 = vmatprep.subr.bf16.mxu0 0
    %147 = vmatpush2.bf16.msra.mxu0 0
    %148 = vmatprep.subr.bf16.mxu0 0
    %149 = vmatpush2.bf16.msra.mxu0 0
    %150 = vmatprep.subr.bf16.mxu0 0
    %151 = vmatpush2.bf16.msra.mxu0 0
    %152 = vmatprep.subr.bf16.mxu0 0
    %153 = vmatpush2.bf16.msra.mxu0 0
    %154 = vmatprep.subr.bf16.mxu0 0
    %155 = vmatpush2.bf16.msra.mxu0 0
    %156 = vmatprep.mubr.bf16.mxu0 0
    %157 = vmatmul.mubr.bf16.gmra.mxu0 %v113
    %v158 = vpop.f32.mrf.mxu0
    %v159 = vadd.f32 %v54, %v158
    %v160 = vpop.f32.mrf.mxu0
    %v161 = vadd.f32 %v58, %v160
    %v162 = vpop.f32.mrf.mxu0
    %v163 = vadd.f32 %v54, %v162
    %v164 = vpop.f32.mrf.mxu0
    %v165 = vadd.f32 %v58, %v164
    %166 = vmatprep.mubr.bf16.mxu0 0
    %167 = vmatmul.mubr.bf16.gmra.mxu0 %v116
    %v168 = vpop.f32.mrf.mxu0
    %v169 = vadd.f32 %v54, %v168
    %v170 = vpop.f32.mrf.mxu0
    %v171 = vadd.f32 %v58, %v170
    %v172 = vpop.f32.mrf.mxu0
    %v173 = vadd.f32 %v54, %v172
    %v174 = vpop.f32.mrf.mxu0
    %v175 = vadd.f32 %v58, %v174
    %176 = vmatprep.mubr.bf16.mxu0 0
    %177 = vmatmul.mubr.bf16.gmra.mxu0 %v119
    %v178 = vpop.f32.mrf.mxu0
    %v179 = vadd.f32 %v54, %v178
    %v180 = vpop.f32.mrf.mxu0
    %v181 = vadd.f32 %v58, %v180
    %v182 = vpop.f32.mrf.mxu0
    %v183 = vadd.f32 %v54, %v182
    %v184 = vpop.f32.mrf.mxu0
    %v185 = vadd.f32 %v58, %v184
    %186 = vmatprep.mubr.bf16.mxu0 0
    %187 = vmatmul.mubr.bf16.gmra.mxu0 %v122
    %v188 = vpop.f32.mrf.mxu0
    %v189 = vadd.f32 %v54, %v188
    %v190 = vpop.f32.mrf.mxu0
    %v191 = vadd.f32 %v58, %v190
    %v192 = vpop.f32.mrf.mxu0
    %v193 = vadd.f32 %v54, %v192
    %v194 = vpop.f32.mrf.mxu0
    %v195 = vadd.f32 %v58, %v194
    %196 = vdwg.mxu0
    %197 = vmatprep.subr.bf16.mxu0 0
    %198 = vmatpush1.bf16.msra.mxu0 0
    %199 = vmatprep.subr.bf16.mxu0 0
    %200 = vmatpush1.bf16.msra.mxu0 0
    %201 = vmatprep.subr.bf16.mxu0 0
    %202 = vmatpush1.bf16.msra.mxu0 0
    %203 = vmatprep.subr.bf16.mxu0 0
    %204 = vmatpush1.bf16.msra.mxu0 0
    %205 = vmatprep.subr.bf16.mxu0 0
    %206 = vmatpush1.bf16.msra.mxu0 0
    %207 = vmatprep.subr.bf16.mxu0 0
    %208 = vmatpush1.bf16.msra.mxu0 0
    %209 = vmatprep.subr.bf16.mxu0 %v102
    %210 = vmatpush1.bf16.msra.mxu0 %v101
    %211 = vmatprep.subr.bf16.mxu0 %v98
    %212 = vmatpush1.bf16.msra.mxu0 %v97
    %213 = vmatprep.subr.bf16.mxu0 0
    %214 = vmatpush2.bf16.msra.mxu0 0
    %215 = vmatprep.subr.bf16.mxu0 0
    %216 = vmatpush2.bf16.msra.mxu0 0
    %217 = vmatprep.subr.bf16.mxu0 0
    %218 = vmatpush2.bf16.msra.mxu0 0
    %219 = vmatprep.subr.bf16.mxu0 0
    %220 = vmatpush2.bf16.msra.mxu0 0
    %221 = vmatprep.subr.bf16.mxu0 0
    %222 = vmatpush2.bf16.msra.mxu0 0
    %223 = vmatprep.subr.bf16.mxu0 0
    %224 = vmatpush2.bf16.msra.mxu0 0
    %225 = vmatprep.subr.bf16.mxu0 0
    %226 = vmatpush2.bf16.msra.mxu0 0
    %227 = vmatprep.subr.bf16.mxu0 0
    %228 = vmatpush2.bf16.msra.mxu0 0
    %229 = vmatprep.mubr.bf16.mxu0 0
    %230 = vmatmul.mubr.bf16.gmra.mxu0 %v113
    %v231 = vpop.f32.mrf.mxu0
    %v232 = vadd.f32 %v62, %v231
    %v233 = vpop.f32.mrf.mxu0
    %v234 = vadd.f32 %v66, %v233
    %v235 = vpop.f32.mrf.mxu0
    %v236 = vadd.f32 %v62, %v235
    %v237 = vpop.f32.mrf.mxu0
    %v238 = vadd.f32 %v66, %v237
    %239 = vmatprep.mubr.bf16.mxu0 0
    %240 = vmatmul.mubr.bf16.gmra.mxu0 %v116
    %v241 = vpop.f32.mrf.mxu0
    %v242 = vadd.f32 %v62, %v241
    %v243 = vpop.f32.mrf.mxu0
    %v244 = vadd.f32 %v66, %v243
    %v245 = vpop.f32.mrf.mxu0
    %v246 = vadd.f32 %v62, %v245
    %v247 = vpop.f32.mrf.mxu0
    %v248 = vadd.f32 %v66, %v247
    %249 = vmatprep.mubr.bf16.mxu0 0
    %250 = vmatmul.mubr.bf16.gmra.mxu0 %v119
    %v251 = vpop.f32.mrf.mxu0
    %v252 = vadd.f32 %v62, %v251
    %v253 = vpop.f32.mrf.mxu0
    %v254 = vadd.f32 %v66, %v253
    %v255 = vpop.f32.mrf.mxu0
    %v256 = vadd.f32 %v62, %v255
    %v257 = vpop.f32.mrf.mxu0
    %v258 = vadd.f32 %v66, %v257
    %259 = vmatprep.mubr.bf16.mxu0 0
    %260 = vmatmul.mubr.bf16.gmra.mxu0 %v122
    %v261 = vpop.f32.mrf.mxu0
    %v262 = vadd.f32 %v62, %v261
    %v263 = vpop.f32.mrf.mxu0
    %v264 = vadd.f32 %v66, %v263
    %v265 = vpop.f32.mrf.mxu0
    %v266 = vadd.f32 %v62, %v265
    %v267 = vpop.f32.mrf.mxu0
    %v268 = vadd.f32 %v66, %v267
    %269 = vdwg.mxu0
    %270 = vst [vmem:[%s3] sm:$0xff] %v159
    %271 = vst [vmem:[%s3 + $0x8] sm:$0xff] %v161
    %272 = vst [vmem:[%s3 + $0x10] sm:$0xff] %v232
    %273 = vst [vmem:[%s3 + $0x18] sm:$0xff] %v234
    %274 = vst [vmem:[%s3 + $0x20] sm:$0xff] %v163
    %275 = vst [vmem:[%s3 + $0x28] sm:$0xff] %v165
    %276 = vst [vmem:[%s3 + $0x30] sm:$0xff] %v236
    %277 = vst [vmem:[%s3 + $0x38] sm:$0xff] %v238
    %278 = vst [vmem:[%s3 + $0x40] sm:$0xff] %v169
    %279 = vst [vmem:[%s3 + $0x48] sm:$0xff] %v171
    %280 = vst [vmem:[%s3 + $0x50] sm:$0xff] %v242
    %281 = vst [vmem:[%s3 + $0x58] sm:$0xff] %v244
    %282 = vst [vmem:[%s3 + $0x60] sm:$0xff] %v173
    %283 = vst [vmem:[%s3 + $0x68] sm:$0xff] %v175
    %284 = vst [vmem:[%s3 + $0x70] sm:$0xff] %v246
    %285 = vst [vmem:[%s3 + $0x78] sm:$0xff] %v248
    %286 = vst [vmem:[%s3 + $0x80] sm:$0xff] %v179
    %287 = vst [vmem:[%s3 + $0x88] sm:$0xff] %v181
    %288 = vst [vmem:[%s3 + $0x90] sm:$0xff] %v252
    %289 = vst [vmem:[%s3 + $0x98] sm:$0xff] %v254
    %290 = vst [vmem:[%s3 + $0xa0] sm:$0xff] %v183
    %291 = vst [vmem:[%s3 + $0xa8] sm:$0xff] %v185
    %292 = vst [vmem:[%s3 + $0xb0] sm:$0xff] %v256
    %293 = vst [vmem:[%s3 + $0xb8] sm:$0xff] %v258
    %294 = vst [vmem:[%s3 + $0xc0] sm:$0xff] %v189
    %295 = vst [vmem:[%s3 + $0xc8] sm:$0xff] %v191
    %296 = vst [vmem:[%s3 + $0xd0] sm:$0xff] %v262
    %297 = vst [vmem:[%s3 + $0xd8] sm:$0xff] %v264
    %298 = vst [vmem:[%s3 + $0xe0] sm:$0xff] %v193
    %299 = vst [vmem:[%s3 + $0xe8] sm:$0xff] %v195
    %300 = vst [vmem:[%s3 + $0xf0] sm:$0xff] %v266
    %301 = vst [vmem:[%s3 + $0xf8] sm:$0xff] %v268
    // Predicated region
    $region18: #{decoder_rnn_forward.3} parent=1 // pred_check
      _
    $region19: #{decoder_rnn_forward.3} parent=1 // pred_check_branch
      %303 = sbr.rel (0) target = $region21
    $region20: #{decoder_rnn_forward.3} parent=1 // pred_region
      _
    $region21: #{decoder_rnn_forward.3} parent=1 // pred_fallthru
      _
    // Predicated region
    $region22: #{decoder_rnn_forward.3} parent=1 // pred_check
      _
    $region23: #{decoder_rnn_forward.3} parent=1 // pred_check_branch
      %305 = sbr.rel (0) target = $region25
    $region24: #{decoder_rnn_forward.3} parent=1 // pred_region
      _
    $region25: #{decoder_rnn_forward.3} parent=1 // pred_fallthru
      _
    %306 = vsyncpa [#allocation3], 1

// kernel: decoder_rnn_forward.4
$region0: #{decoder_rnn_forward.4}
  #allocation0 [shape = 'u32[]', space=smem, size = 0x4, offset = 0x4, fixed_abs, tag = 'smem constant byte address 0x4 - core index']
  #allocation1 [shape = 'u32[144,128]{1,0:T(1,128)}', space=vmem, size = 0x12000, scoped, tag = 'internal scratch']
  %s0 = inlined_call_operand.vmem [shape: f32[8,8,512], index: 0, kind: input, shape index: {}]
  %s1 = inlined_call_operand.vmem [shape: f32[128,512], index: 1, kind: input, shape index: {}]
  %s2 = inlined_call_operand.vmem [shape: f32[128,512], index: 2, kind: input, shape index: {}]
  %s3 = inlined_call_operand.hbm [shape: f32[128,512], index: 3, kind: input, shape index: {}]
  %s4 = inlined_call_operand.vmem [shape: f32[8,512], index: 4, kind: input, shape index: {}]
  %s5 = inlined_call_operand.vmem [shape: f32[8,8,128], index: 5, kind: output, shape index: {}]
  %s6 = sld [smem:[#allocation0]]
  $region41: #{decoder_rnn_forward.4} parent=0
    _
  %s8 = ssub.s32 1, %s6
  %s9 = scalar_select 0, %s8, %s6
  $region1: #{decoder_rnn_forward.4} parent=0
    #allocation2 [shape = 'u8[262144]{0}', space=vmem, size = 0x40000, scoped, tag = 'input window, operand 3, single buffered']
    #allocation3 [shape = 's32[1]{0}', space=sflag, size = 0x4, scoped, tag = 'scoped memory for decoder_rnn_forward.4']
    %10 = vsyncpa [#allocation3], 0
    // Predicated region
    $region2: #{decoder_rnn_forward.4} parent=1 // pred_check
      _
    $region3: #{decoder_rnn_forward.4} parent=1 // pred_check_branch
      %12 = sbr.rel (0) target = $region5
    $region4: #{decoder_rnn_forward.4} parent=1 // pred_region
      _
    $region5: #{decoder_rnn_forward.4} parent=1 // pred_fallthru
      _
    // Predicated region
    $region6: #{decoder_rnn_forward.4} parent=1 // pred_check
      _
    $region7: #{decoder_rnn_forward.4} parent=1 // pred_check_branch
      %14 = sbr.rel (0) target = $region9
    $region8: #{decoder_rnn_forward.4} parent=1 // pred_region
      _
    $region9: #{decoder_rnn_forward.4} parent=1 // pred_fallthru
      _
    // Predicated region
    $region10: #{decoder_rnn_forward.4} parent=1 // pred_check
      _
    $region11: #{decoder_rnn_forward.4} parent=1 // pred_check_branch
      %16 = sbr.rel (0) target = $region13
    $region12: #{decoder_rnn_forward.4} parent=1 // pred_region
      _
    $region13: #{decoder_rnn_forward.4} parent=1 // pred_fallthru
      _
    // Predicated region
    $region14: #{decoder_rnn_forward.4} parent=1 // pred_check
      _
    $region15: #{decoder_rnn_forward.4} parent=1 // pred_check_branch
      %18 = sbr.rel (0) target = $region17
    $region16: #{decoder_rnn_forward.4} parent=1 // pred_region
      %s20 = ssub.s32 8192, 8192
      %21 = vsyncadd [#allocation3], %s20
      %s22 = sshll.u32 [#allocation2], 4
      %s23 = int_to_ptr.vmem [resolvable:$true] %s22
      %28 = dma.hbm_to_vmem [thread:$0]  %s3, 8192, %s23, [#allocation3], 512, 512, 32
    $region17: #{decoder_rnn_forward.4} parent=1 // pred_fallthru
      _
    // Predicated region
    $region18: #{decoder_rnn_forward.4} parent=1 // pred_check
      _
    $region19: #{decoder_rnn_forward.4} parent=1 // pred_check_branch
      %30 = sbr.rel (0) target = $region21
    $region20: #{decoder_rnn_forward.4} parent=1 // pred_region
      _
    $region21: #{decoder_rnn_forward.4} parent=1 // pred_fallthru
      _
    // Predicated region
    $region22: #{decoder_rnn_forward.4} parent=1 // pred_check
      _
    $region23: #{decoder_rnn_forward.4} parent=1 // pred_check_branch
      %32 = sbr.rel (0) target = $region25
    $region24: #{decoder_rnn_forward.4} parent=1 // pred_region
      %33 = dma.done [#allocation3], 8192
    $region25: #{decoder_rnn_forward.4} parent=1 // pred_fallthru
      _
    loop: start=0, step=1, limit=8
    $region26: #{decoder_rnn_forward.4} parent=1 // loop_pre_header
      _
    $region27: #{decoder_rnn_forward.4} parent=1 // loop_header
      %s35 = sphi 0, %s39
      %p36 = scmp.ge.s32.totalorder %s35, 8
      %v40 = vphi 0.0, %v284
      %v41 = vphi 0.0, %v282
      %v42 = vphi 0.0, %v728
      %v43 = vphi 0.0, %v726
    $region28: #{decoder_rnn_forward.4} parent=1 // loop_header_branch
      %38 = sbr.rel (%p36) target = $region32
    $region29: #{decoder_rnn_forward.4} parent=1 // loop_body
      %s44 = smul.u32 %s35, 4
      %s45 = smul.addr %s44, 8
      %s46 = scalar_lea.vmem %s0, %s45
      %v47 = vld [vmem:[%s46] sm:$0xff]
      %v48 = vld [vmem:[%s46 + $0x8] sm:$0xff]
      %v49 = vld [vmem:[%s46 + $0x10] sm:$0xff]
      %v50 = vld [vmem:[%s46 + $0x18] sm:$0xff]
      %v51 = vld [vmem:[%s1] sm:$0xff]
      %v52 = vld [vmem:[%s1 + $0x8] sm:$0xff]
      %v53 = vld [vmem:[%s1 + $0x10] sm:$0xff]
      %v54 = vld [vmem:[%s1 + $0x18] sm:$0xff]
      %v55 = vld [vmem:[%s1 + $0x20] sm:$0xff]
      %v56 = vld [vmem:[%s1 + $0x28] sm:$0xff]
      %v57 = vld [vmem:[%s1 + $0x30] sm:$0xff]
      %v58 = vld [vmem:[%s1 + $0x38] sm:$0xff]
      %v59 = vld [vmem:[%s1 + $0x40] sm:$0xff]
      %v60 = vld [vmem:[%s1 + $0x48] sm:$0xff]
      %v61 = vld [vmem:[%s1 + $0x50] sm:$0xff]
      %v62 = vld [vmem:[%s1 + $0x58] sm:$0xff]
      %v63 = vld [vmem:[%s1 + $0x60] sm:$0xff]
      %v64 = vld [vmem:[%s1 + $0x68] sm:$0xff]
      %v65 = vld [vmem:[%s1 + $0x70] sm:$0xff]
      %v66 = vld [vmem:[%s1 + $0x78] sm:$0xff]
      %v67 = vld [vmem:[%s1 + $0x80] sm:$0xff]
      %v68 = vld [vmem:[%s1 + $0x88] sm:$0xff]
      %v69 = vld [vmem:[%s1 + $0x90] sm:$0xff]
      %v70 = vld [vmem:[%s1 + $0x98] sm:$0xff]
      %v71 = vld [vmem:[%s1 + $0xa0] sm:$0xff]
      %v72 = vld [vmem:[%s1 + $0xa8] sm:$0xff]
      %v73 = vld [vmem:[%s1 + $0xb0] sm:$0xff]
      %v74 = vld [vmem:[%s1 + $0xb8] sm:$0xff]
      %v75 = vld [vmem:[%s1 + $0xc0] sm:$0xff]
      %v76 = vld [vmem:[%s1 + $0xc8] sm:$0xff]
      %v77 = vld [vmem:[%s1 + $0xd0] sm:$0xff]
      %v78 = vld [vmem:[%s1 + $0xd8] sm:$0xff]
      %v79 = vld [vmem:[%s1 + $0xe0] sm:$0xff]
      %v80 = vld [vmem:[%s1 + $0xe8] sm:$0xff]
      %v81 = vld [vmem:[%s1 + $0xf0] sm:$0xff]
      %v82 = vld [vmem:[%s1 + $0xf8] sm:$0xff]
      %v83 = vld [vmem:[%s1 + $0x100] sm:$0xff]
      %v84 = vld [vmem:[%s1 + $0x108] sm:$0xff]
      %v85 = vld [vmem:[%s1 + $0x110] sm:$0xff]
      %v86 = vld [vmem:[%s1 + $0x118] sm:$0xff]
      %v87 = vld [vmem:[%s1 + $0x120] sm:$0xff]
      %v88 = vld [vmem:[%s1 + $0x128] sm:$0xff]
      %v89 = vld [vmem:[%s1 + $0x130] sm:$0xff]
      %v90 = vld [vmem:[%s1 + $0x138] sm:$0xff]
      %v91 = vld [vmem:[%s1 + $0x140] sm:$0xff]
      %v92 = vld [vmem:[%s1 + $0x148] sm:$0xff]
      %v93 = vld [vmem:[%s1 + $0x150] sm:$0xff]
      %v94 = vld [vmem:[%s1 + $0x158] sm:$0xff]
      %v95 = vld [vmem:[%s1 + $0x160] sm:$0xff]
      %v96 = vld [vmem:[%s1 + $0x168] sm:$0xff]
      %v97 = vld [vmem:[%s1 + $0x170] sm:$0xff]
      %v98 = vld [vmem:[%s1 + $0x178] sm:$0xff]
      %v99 = vld [vmem:[%s1 + $0x180] sm:$0xff]
      %v100 = vld [vmem:[%s1 + $0x188] sm:$0xff]
      %v101 = vld [vmem:[%s1 + $0x190] sm:$0xff]
      %v102 = vld [vmem:[%s1 + $0x198] sm:$0xff]
      %v103 = vld [vmem:[%s1 + $0x1a0] sm:$0xff]
      %v104 = vld [vmem:[%s1 + $0x1a8] sm:$0xff]
      %v105 = vld [vmem:[%s1 + $0x1b0] sm:$0xff]
      %v106 = vld [vmem:[%s1 + $0x1b8] sm:$0xff]
      %v107 = vld [vmem:[%s1 + $0x1c0] sm:$0xff]
      %v108 = vld [vmem:[%s1 + $0x1c8] sm:$0xff]
      %v109 = vld [vmem:[%s1 + $0x1d0] sm:$0xff]
      %v110 = vld [vmem:[%s1 + $0x1d8] sm:$0xff]
      %v111 = vld [vmem:[%s1 + $0x1e0] sm:$0xff]
      %v112 = vld [vmem:[%s1 + $0x1e8] sm:$0xff]
      %v113 = vld [vmem:[%s1 + $0x1f0] sm:$0xff]
      %v114 = vld [vmem:[%s1 + $0x1f8] sm:$0xff]
      %115 = vmatprep.subr.mxu0 %v112
      %116 = vmatpush1.msra.mxu0 %v111
      %117 = vmatprep.subr.mxu0 %v108
      %118 = vmatpush1.msra.mxu0 %v107
      %119 = vmatprep.subr.mxu0 %v104
      %120 = vmatpush1.msra.mxu0 %v103
      %121 = vmatprep.subr.mxu0 %v100
      %122 = vmatpush1.msra.mxu0 %v99
      %123 = vmatprep.subr.mxu0 %v96
      %124 = vmatpush1.msra.mxu0 %v95
      %125 = vmatprep.subr.mxu0 %v92
      %126 = vmatpush1.msra.mxu0 %v91
      %127 = vmatprep.subr.mxu0 %v88
      %128 = vmatpush1.msra.mxu0 %v87
      %129 = vmatprep.subr.mxu0 %v84
      %130 = vmatpush1.msra.mxu0 %v83
      %131 = vmatprep.subr.mxu0 %v80
      %132 = vmatpush1.msra.mxu0 %v79
      %133 = vmatprep.subr.mxu0 %v76
      %134 = vmatpush1.msra.mxu0 %v75
      %135 = vmatprep.subr.mxu0 %v72
      %136 = vmatpush1.msra.mxu0 %v71
      %137 = vmatprep.subr.mxu0 %v68
      %138 = vmatpush1.msra.mxu0 %v67
      %139 = vmatprep.subr.mxu0 %v64
      %140 = vmatpush1.msra.mxu0 %v63
      %141 = vmatprep.subr.mxu0 %v60
      %142 = vmatpush1.msra.mxu0 %v59
      %143 = vmatprep.subr.mxu0 %v56
      %144 = vmatpush1.msra.mxu0 %v55
      %145 = vmatprep.subr.mxu0 %v52
      %146 = vmatpush1.msra.mxu0 %v51
      %147 = vmatprep.subr.mxu0 0.0
      %148 = vmatpush2.msra.mxu0 0.0
      %149 = vmatprep.subr.mxu0 0.0
      %150 = vmatpush2.msra.mxu0 0.0
      %151 = vmatprep.subr.mxu0 0.0
      %152 = vmatpush2.msra.mxu0 0.0
      %153 = vmatprep.subr.mxu0 0.0
      %154 = vmatpush2.msra.mxu0 0.0
      %155 = vmatprep.subr.mxu0 0.0
      %156 = vmatpush2.msra.mxu0 0.0
      %157 = vmatprep.subr.mxu0 0.0
      %158 = vmatpush2.msra.mxu0 0.0
      %159 = vmatprep.subr.mxu0 0.0
      %160 = vmatpush2.msra.mxu0 0.0
      %161 = vmatprep.subr.mxu0 0.0
      %162 = vmatpush2.msra.mxu0 0.0
      %163 = vmatprep.subr.mxu0 0.0
      %164 = vmatpush2.msra.mxu0 0.0
      %165 = vmatprep.subr.mxu0 0.0
      %166 = vmatpush2.msra.mxu0 0.0
      %167 = vmatprep.subr.mxu0 0.0
      %168 = vmatpush2.msra.mxu0 0.0
      %169 = vmatprep.subr.mxu0 0.0
      %170 = vmatpush2.msra.mxu0 0.0
      %171 = vmatprep.subr.mxu0 0.0
      %172 = vmatpush2.msra.mxu0 0.0
      %173 = vmatprep.subr.mxu0 0.0
      %174 = vmatpush2.msra.mxu0 0.0
      %175 = vmatprep.subr.mxu0 0.0
      %176 = vmatpush2.msra.mxu0 0.0
      %177 = vmatprep.subr.mxu0 0.0
      %178 = vmatpush2.msra.mxu0 0.0
      %179 = vmatprep.mubr.f32.mxu0 0.0
      %180 = vmatmul.mubr.f32.gmra.mxu0 %v40
      %v181 = vpop.f32.mrf.mxu0
      %v182 = vadd.f32 0.0, %v181
      %v183 = vpop.f32.mrf.mxu0
      %v184 = vadd.f32 0.0, %v183
      %185 = vdwg.mxu0
      %186 = vmatprep.subr.mxu0 %v114
      %187 = vmatpush1.msra.mxu0 %v113
      %188 = vmatprep.subr.mxu0 %v110
      %189 = vmatpush1.msra.mxu0 %v109
      %190 = vmatprep.subr.mxu0 %v106
      %191 = vmatpush1.msra.mxu0 %v105
      %192 = vmatprep.subr.mxu0 %v102
      %193 = vmatpush1.msra.mxu0 %v101
      %194 = vmatprep.subr.mxu0 %v98
      %195 = vmatpush1.msra.mxu0 %v97
      %196 = vmatprep.subr.mxu0 %v94
      %197 = vmatpush1.msra.mxu0 %v93
      %198 = vmatprep.subr.mxu0 %v90
      %199 = vmatpush1.msra.mxu0 %v89
      %200 = vmatprep.subr.mxu0 %v86
      %201 = vmatpush1.msra.mxu0 %v85
      %202 = vmatprep.subr.mxu0 %v82
      %203 = vmatpush1.msra.mxu0 %v81
      %204 = vmatprep.subr.mxu0 %v78
      %205 = vmatpush1.msra.mxu0 %v77
      %206 = vmatprep.subr.mxu0 %v74
      %207 = vmatpush1.msra.mxu0 %v73
      %208 = vmatprep.subr.mxu0 %v70
      %209 = vmatpush1.msra.mxu0 %v69
      %210 = vmatprep.subr.mxu0 %v66
      %211 = vmatpush1.msra.mxu0 %v65
      %212 = vmatprep.subr.mxu0 %v62
      %213 = vmatpush1.msra.mxu0 %v61
      %214 = vmatprep.subr.mxu0 %v58
      %215 = vmatpush1.msra.mxu0 %v57
      %216 = vmatprep.subr.mxu0 %v54
      %217 = vmatpush1.msra.mxu0 %v53
      %218 = vmatprep.subr.mxu0 0.0
      %219 = vmatpush2.msra.mxu0 0.0
      %220 = vmatprep.subr.mxu0 0.0
      %221 = vmatpush2.msra.mxu0 0.0
      %222 = vmatprep.subr.mxu0 0.0
      %223 = vmatpush2.msra.mxu0 0.0
      %224 = vmatprep.subr.mxu0 0.0
      %225 = vmatpush2.msra.mxu0 0.0
      %226 = vmatprep.subr.mxu0 0.0
      %227 = vmatpush2.msra.mxu0 0.0
      %228 = vmatprep.subr.mxu0 0.0
      %229 = vmatpush2.msra.mxu0 0.0
      %230 = vmatprep.subr.mxu0 0.0
      %231 = vmatpush2.msra.mxu0 0.0
      %232 = vmatprep.subr.mxu0 0.0
      %233 = vmatpush2.msra.mxu0 0.0
      %234 = vmatprep.subr.mxu0 0.0
      %235 = vmatpush2.msra.mxu0 0.0
      %236 = vmatprep.subr.mxu0 0.0
      %237 = vmatpush2.msra.mxu0 0.0
      %238 = vmatprep.subr.mxu0 0.0
      %239 = vmatpush2.msra.mxu0 0.0
      %240 = vmatprep.subr.mxu0 0.0
      %241 = vmatpush2.msra.mxu0 0.0
      %242 = vmatprep.subr.mxu0 0.0
      %243 = vmatpush2.msra.mxu0 0.0
      %244 = vmatprep.subr.mxu0 0.0
      %245 = vmatpush2.msra.mxu0 0.0
      %246 = vmatprep.subr.mxu0 0.0
      %247 = vmatpush2.msra.mxu0 0.0
      %248 = vmatprep.subr.mxu0 0.0
      %249 = vmatpush2.msra.mxu0 0.0
      %250 = vmatprep.mubr.f32.mxu0 0.0
      %251 = vmatmul.mubr.f32.gmra.mxu0 %v40
      %v252 = vpop.f32.mrf.mxu0
      %v253 = vadd.f32 0.0, %v252
      %v254 = vpop.f32.mrf.mxu0
      %v255 = vadd.f32 0.0, %v254
      %256 = vdwg.mxu0
      %v257 = vadd.f32 %v47, %v182
      %v258 = vadd.f32 %v48, %v184
      %v259 = vadd.f32 %v49, %v253
      %v260 = vadd.f32 %v50, %v255
      %v261 = vxor.u32 %v257, 2147483648
      %v262 = vmul.f32 %v261, 1.442695
      %v263 = vpow.pop %v262
      %v264 = vadd.f32 %v263, 1.0
      %v265 = vrcp.pop %v264
      %v266 = vmul.f32 1.0, %v265
      %v267 = vxor.u32 %v258, 2147483648
      %v268 = vmul.f32 %v267, 1.442695
      %v269 = vpow.pop %v268
      %v270 = vadd.f32 %v269, 1.0
      %v271 = vrcp.pop %v270
      %v272 = vmul.f32 1.0, %v271
      %v273 = vtanh.pop %v259
      %v274 = vxor.u32 %v260, 2147483648
      %v275 = vmul.f32 %v274, 1.442695
      %v276 = vpow.pop %v275
      %v277 = vadd.f32 %v276, 1.0
      %v278 = vrcp.pop %v277
      %v279 = vmul.f32 1.0, %v278
      %v280 = vmul.f32 %v272, %v41
      %v281 = vmul.f32 %v266, %v273
      %v282 = vadd.f32 %v280, %v281
      %v283 = vtanh.pop %v282
      %v284 = vmul.f32 %v279, %v283
      %v285 = vld [vmem:[%s2] sm:$0xff]
      %v286 = vld [vmem:[%s2 + $0x8] sm:$0xff]
      %v287 = vld [vmem:[%s2 + $0x10] sm:$0xff]
      %v288 = vld [vmem:[%s2 + $0x18] sm:$0xff]
      %v289 = vld [vmem:[%s2 + $0x20] sm:$0xff]
      %v290 = vld [vmem:[%s2 + $0x28] sm:$0xff]
      %v291 = vld [vmem:[%s2 + $0x30] sm:$0xff]
      %v292 = vld [vmem:[%s2 + $0x38] sm:$0xff]
      %v293 = vld [vmem:[%s2 + $0x40] sm:$0xff]
      %v294 = vld [vmem:[%s2 + $0x48] sm:$0xff]
      %v295 = vld [vmem:[%s2 + $0x50] sm:$0xff]
      %v296 = vld [vmem:[%s2 + $0x58] sm:$0xff]
      %v297 = vld [vmem:[%s2 + $0x60] sm:$0xff]
      %v298 = vld [vmem:[%s2 + $0x68] sm:$0xff]
      %v299 = vld [vmem:[%s2 + $0x70] sm:$0xff]
      %v300 = vld [vmem:[%s2 + $0x78] sm:$0xff]
      %v301 = vld [vmem:[%s2 + $0x80] sm:$0xff]
      %v302 = vld [vmem:[%s2 + $0x88] sm:$0xff]
      %v303 = vld [vmem:[%s2 + $0x90] sm:$0xff]
      %v304 = vld [vmem:[%s2 + $0x98] sm:$0xff]
      %v305 = vld [vmem:[%s2 + $0xa0] sm:$0xff]
      %v306 = vld [vmem:[%s2 + $0xa8] sm:$0xff]
      %v307 = vld [vmem:[%s2 + $0xb0] sm:$0xff]
      %v308 = vld [vmem:[%s2 + $0xb8] sm:$0xff]
      %v309 = vld [vmem:[%s2 + $0xc0] sm:$0xff]
      %v310 = vld [vmem:[%s2 + $0xc8] sm:$0xff]
      %v311 = vld [vmem:[%s2 + $0xd0] sm:$0xff]
      %v312 = vld [vmem:[%s2 + $0xd8] sm:$0xff]
      %v313 = vld [vmem:[%s2 + $0xe0] sm:$0xff]
      %v314 = vld [vmem:[%s2 + $0xe8] sm:$0xff]
      %v315 = vld [vmem:[%s2 + $0xf0] sm:$0xff]
      %v316 = vld [vmem:[%s2 + $0xf8] sm:$0xff]
      %v317 = vld [vmem:[%s2 + $0x100] sm:$0xff]
      %v318 = vld [vmem:[%s2 + $0x108] sm:$0xff]
      %v319 = vld [vmem:[%s2 + $0x110] sm:$0xff]
      %v320 = vld [vmem:[%s2 + $0x118] sm:$0xff]
      %v321 = vld [vmem:[%s2 + $0x120] sm:$0xff]
      %v322 = vld [vmem:[%s2 + $0x128] sm:$0xff]
      %v323 = vld [vmem:[%s2 + $0x130] sm:$0xff]
      %v324 = vld [vmem:[%s2 + $0x138] sm:$0xff]
      %v325 = vld [vmem:[%s2 + $0x140] sm:$0xff]
      %v326 = vld [vmem:[%s2 + $0x148] sm:$0xff]
      %v327 = vld [vmem:[%s2 + $0x150] sm:$0xff]
      %v328 = vld [vmem:[%s2 + $0x158] sm:$0xff]
      %v329 = vld [vmem:[%s2 + $0x160] sm:$0xff]
      %v330 = vld [vmem:[%s2 + $0x168] sm:$0xff]
      %v331 = vld [vmem:[%s2 + $0x170] sm:$0xff]
      %v332 = vld [vmem:[%s2 + $0x178] sm:$0xff]
      %v333 = vld [vmem:[%s2 + $0x180] sm:$0xff]
      %v334 = vld [vmem:[%s2 + $0x188] sm:$0xff]
      %v335 = vld [vmem:[%s2 + $0x190] sm:$0xff]
      %v336 = vld [vmem:[%s2 + $0x198] sm:$0xff]
      %v337 = vld [vmem:[%s2 + $0x1a0] sm:$0xff]
      %v338 = vld [vmem:[%s2 + $0x1a8] sm:$0xff]
      %v339 = vld [vmem:[%s2 + $0x1b0] sm:$0xff]
      %v340 = vld [vmem:[%s2 + $0x1b8] sm:$0xff]
      %v341 = vld [vmem:[%s2 + $0x1c0] sm:$0xff]
      %v342 = vld [vmem:[%s2 + $0x1c8] sm:$0xff]
      %v343 = vld [vmem:[%s2 + $0x1d0] sm:$0xff]
      %v344 = vld [vmem:[%s2 + $0x1d8] sm:$0xff]
      %v345 = vld [vmem:[%s2 + $0x1e0] sm:$0xff]
      %v346 = vld [vmem:[%s2 + $0x1e8] sm:$0xff]
      %v347 = vld [vmem:[%s2 + $0x1f0] sm:$0xff]
      %v348 = vld [vmem:[%s2 + $0x1f8] sm:$0xff]
      %v349 = vld [vmem:[#allocation2] sm:$0xff]
      %v350 = vld [vmem:[#allocation2 + $0x8] sm:$0xff]
      %v351 = vld [vmem:[#allocation2 + $0x10] sm:$0xff]
      %v352 = vld [vmem:[#allocation2 + $0x18] sm:$0xff]
      %v353 = vld [vmem:[#allocation2 + $0x20] sm:$0xff]
      %v354 = vld [vmem:[#allocation2 + $0x28] sm:$0xff]
      %v355 = vld [vmem:[#allocation2 + $0x30] sm:$0xff]
      %v356 = vld [vmem:[#allocation2 + $0x38] sm:$0xff]
      %v357 = vld [vmem:[#allocation2 + $0x40] sm:$0xff]
      %v358 = vld [vmem:[#allocation2 + $0x48] sm:$0xff]
      %v359 = vld [vmem:[#allocation2 + $0x50] sm:$0xff]
      %v360 = vld [vmem:[#allocation2 + $0x58] sm:$0xff]
      %v361 = vld [vmem:[#allocation2 + $0x60] sm:$0xff]
      %v362 = vld [vmem:[#allocation2 + $0x68] sm:$0xff]
      %v363 = vld [vmem:[#allocation2 + $0x70] sm:$0xff]
      %v364 = vld [vmem:[#allocation2 + $0x78] sm:$0xff]
      %v365 = vld [vmem:[#allocation2 + $0x80] sm:$0xff]
      %v366 = vld [vmem:[#allocation2 + $0x88] sm:$0xff]
      %v367 = vld [vmem:[#allocation2 + $0x90] sm:$0xff]
      %v368 = vld [vmem:[#allocation2 + $0x98] sm:$0xff]
      %v369 = vld [vmem:[#allocation2 + $0xa0] sm:$0xff]
      %v370 = vld [vmem:[#allocation2 + $0xa8] sm:$0xff]
      %v371 = vld [vmem:[#allocation2 + $0xb0] sm:$0xff]
      %v372 = vld [vmem:[#allocation2 + $0xb8] sm:$0xff]
      %v373 = vld [vmem:[#allocation2 + $0xc0] sm:$0xff]
      %v374 = vld [vmem:[#allocation2 + $0xc8] sm:$0xff]
      %v375 = vld [vmem:[#allocation2 + $0xd0] sm:$0xff]
      %v376 = vld [vmem:[#allocation2 + $0xd8] sm:$0xff]
      %v377 = vld [vmem:[#allocation2 + $0xe0] sm:$0xff]
      %v378 = vld [vmem:[#allocation2 + $0xe8] sm:$0xff]
      %v379 = vld [vmem:[#allocation2 + $0xf0] sm:$0xff]
      %v380 = vld [vmem:[#allocation2 + $0xf8] sm:$0xff]
      %v381 = vld [vmem:[#allocation2 + $0x100] sm:$0xff]
      %v382 = vld [vmem:[#allocation2 + $0x108] sm:$0xff]
      %v383 = vld [vmem:[#allocation2 + $0x110] sm:$0xff]
      %v384 = vld [vmem:[#allocation2 + $0x118] sm:$0xff]
      %v385 = vld [vmem:[#allocation2 + $0x120] sm:$0xff]
      %v386 = vld [vmem:[#allocation2 + $0x128] sm:$0xff]
      %v387 = vld [vmem:[#allocation2 + $0x130] sm:$0xff]
      %v388 = vld [vmem:[#allocation2 + $0x138] sm:$0xff]
      %v389 = vld [vmem:[#allocation2 + $0x140] sm:$0xff]
      %v390 = vld [vmem:[#allocation2 + $0x148] sm:$0xff]
      %v391 = vld [vmem:[#allocation2 + $0x150] sm:$0xff]
      %v392 = vld [vmem:[#allocation2 + $0x158] sm:$0xff]
      %v393 = vld [vmem:[#allocation2 + $0x160] sm:$0xff]
      %v394 = vld [vmem:[#allocation2 + $0x168] sm:$0xff]
      %v395 = vld [vmem:[#allocation2 + $0x170] sm:$0xff]
      %v396 = vld [vmem:[#allocation2 + $0x178] sm:$0xff]
      %v397 = vld [vmem:[#allocation2 + $0x180] sm:$0xff]
      %v398 = vld [vmem:[#allocation2 + $0x188] sm:$0xff]
      %v399 = vld [vmem:[#allocation2 + $0x190] sm:$0xff]
      %v400 = vld [vmem:[#allocation2 + $0x198] sm:$0xff]
      %v401 = vld [vmem:[#allocation2 + $0x1a0] sm:$0xff]
      %v402 = vld [vmem:[#allocation2 + $0x1a8] sm:$0xff]
      %v403 = vld [vmem:[#allocation2 + $0x1b0] sm:$0xff]
      %v404 = vld [vmem:[#allocation2 + $0x1b8] sm:$0xff]
      %v405 = vld [vmem:[#allocation2 + $0x1c0] sm:$0xff]
      %v406 = vld [vmem:[#allocation2 + $0x1c8] sm:$0xff]
      %v407 = vld [vmem:[#allocation2 + $0x1d0] sm:$0xff]
      %v408 = vld [vmem:[#allocation2 + $0x1d8] sm:$0xff]
      %v409 = vld [vmem:[#allocation2 + $0x1e0] sm:$0xff]
      %v410 = vld [vmem:[#allocation2 + $0x1e8] sm:$0xff]
      %v411 = vld [vmem:[#allocation2 + $0x1f0] sm:$0xff]
      %v412 = vld [vmem:[#allocation2 + $0x1f8] sm:$0xff]
      %413 = vmatprep.subr.mxu0 %v410
      %414 = vmatpush1.msra.mxu0 %v409
      %415 = vmatprep.subr.mxu0 %v406
      %416 = vmatpush1.msra.mxu0 %v405
      %417 = vmatprep.subr.mxu0 %v402
      %418 = vmatpush1.msra.mxu0 %v401
      %419 = vmatprep.subr.mxu0 %v398
      %420 = vmatpush1.msra.mxu0 %v397
      %421 = vmatprep.subr.mxu0 %v394
      %422 = vmatpush1.msra.mxu0 %v393
      %423 = vmatprep.subr.mxu0 %v390
      %424 = vmatpush1.msra.mxu0 %v389
      %425 = vmatprep.subr.mxu0 %v386
      %426 = vmatpush1.msra.mxu0 %v385
      %427 = vmatprep.subr.mxu0 %v382
      %428 = vmatpush1.msra.mxu0 %v381
      %429 = vmatprep.subr.mxu0 %v378
      %430 = vmatpush1.msra.mxu0 %v377
      %431 = vmatprep.subr.mxu0 %v374
      %432 = vmatpush1.msra.mxu0 %v373
      %433 = vmatprep.subr.mxu0 %v370
      %434 = vmatpush1.msra.mxu0 %v369
      %435 = vmatprep.subr.mxu0 %v366
      %436 = vmatpush1.msra.mxu0 %v365
      %437 = vmatprep.subr.mxu0 %v362
      %438 = vmatpush1.msra.mxu0 %v361
      %439 = vmatprep.subr.mxu0 %v358
      %440 = vmatpush1.msra.mxu0 %v357
      %441 = vmatprep.subr.mxu0 %v354
      %442 = vmatpush1.msra.mxu0 %v353
      %443 = vmatprep.subr.mxu0 %v350
      %444 = vmatpush1.msra.mxu0 %v349
      %445 = vmatprep.subr.mxu0 0.0
      %446 = vmatpush2.msra.mxu0 0.0
      %447 = vmatprep.subr.mxu0 0.0
      %448 = vmatpush2.msra.mxu0 0.0
      %449 = vmatprep.subr.mxu0 0.0
      %450 = vmatpush2.msra.mxu0 0.0
      %451 = vmatprep.subr.mxu0 0.0
      %452 = vmatpush2.msra.mxu0 0.0
      %453 = vmatprep.subr.mxu0 0.0
      %454 = vmatpush2.msra.mxu0 0.0
      %455 = vmatprep.subr.mxu0 0.0
      %456 = vmatpush2.msra.mxu0 0.0
      %457 = vmatprep.subr.mxu0 0.0
      %458 = vmatpush2.msra.mxu0 0.0
      %459 = vmatprep.subr.mxu0 0.0
      %460 = vmatpush2.msra.mxu0 0.0
      %461 = vmatprep.subr.mxu0 0.0
      %462 = vmatpush2.msra.mxu0 0.0
      %463 = vmatprep.subr.mxu0 0.0
      %464 = vmatpush2.msra.mxu0 0.0
      %465 = vmatprep.subr.mxu0 0.0
      %466 = vmatpush2.msra.mxu0 0.0
      %467 = vmatprep.subr.mxu0 0.0
      %468 = vmatpush2.msra.mxu0 0.0
      %469 = vmatprep.subr.mxu0 0.0
      %470 = vmatpush2.msra.mxu0 0.0
      %471 = vmatprep.subr.mxu0 0.0
      %472 = vmatpush2.msra.mxu0 0.0
      %473 = vmatprep.subr.mxu0 0.0
      %474 = vmatpush2.msra.mxu0 0.0
      %475 = vmatprep.subr.mxu0 0.0
      %476 = vmatpush2.msra.mxu0 0.0
      %477 = vmatprep.mubr.f32.mxu0 0.0
      %478 = vmatmul.mubr.f32.gmra.mxu0 %v42
      %v479 = vpop.f32.mrf.mxu0
      %v480 = vadd.f32 0.0, %v479
      %v481 = vpop.f32.mrf.mxu0
      %v482 = vadd.f32 0.0, %v481
      %483 = vdwg.mxu0
      %484 = vmatprep.subr.mxu0 %v412
      %485 = vmatpush1.msra.mxu0 %v411
      %486 = vmatprep.subr.mxu0 %v408
      %487 = vmatpush1.msra.mxu0 %v407
      %488 = vmatprep.subr.mxu0 %v404
      %489 = vmatpush1.msra.mxu0 %v403
      %490 = vmatprep.subr.mxu0 %v400
      %491 = vmatpush1.msra.mxu0 %v399
      %492 = vmatprep.subr.mxu0 %v396
      %493 = vmatpush1.msra.mxu0 %v395
      %494 = vmatprep.subr.mxu0 %v392
      %495 = vmatpush1.msra.mxu0 %v391
      %496 = vmatprep.subr.mxu0 %v388
      %497 = vmatpush1.msra.mxu0 %v387
      %498 = vmatprep.subr.mxu0 %v384
      %499 = vmatpush1.msra.mxu0 %v383
      %500 = vmatprep.subr.mxu0 %v380
      %501 = vmatpush1.msra.mxu0 %v379
      %502 = vmatprep.subr.mxu0 %v376
      %503 = vmatpush1.msra.mxu0 %v375
      %504 = vmatprep.subr.mxu0 %v372
      %505 = vmatpush1.msra.mxu0 %v371
      %506 = vmatprep.subr.mxu0 %v368
      %507 = vmatpush1.msra.mxu0 %v367
      %508 = vmatprep.subr.mxu0 %v364
      %509 = vmatpush1.msra.mxu0 %v363
      %510 = vmatprep.subr.mxu0 %v360
      %511 = vmatpush1.msra.mxu0 %v359
      %512 = vmatprep.subr.mxu0 %v356
      %513 = vmatpush1.msra.mxu0 %v355
      %514 = vmatprep.subr.mxu0 %v352
      %515 = vmatpush1.msra.mxu0 %v351
      %516 = vmatprep.subr.mxu0 0.0
      %517 = vmatpush2.msra.mxu0 0.0
      %518 = vmatprep.subr.mxu0 0.0
      %519 = vmatpush2.msra.mxu0 0.0
      %520 = vmatprep.subr.mxu0 0.0
      %521 = vmatpush2.msra.mxu0 0.0
      %522 = vmatprep.subr.mxu0 0.0
      %523 = vmatpush2.msra.mxu0 0.0
      %524 = vmatprep.subr.mxu0 0.0
      %525 = vmatpush2.msra.mxu0 0.0
      %526 = vmatprep.subr.mxu0 0.0
      %527 = vmatpush2.msra.mxu0 0.0
      %528 = vmatprep.subr.mxu0 0.0
      %529 = vmatpush2.msra.mxu0 0.0
      %530 = vmatprep.subr.mxu0 0.0
      %531 = vmatpush2.msra.mxu0 0.0
      %532 = vmatprep.subr.mxu0 0.0
      %533 = vmatpush2.msra.mxu0 0.0
      %534 = vmatprep.subr.mxu0 0.0
      %535 = vmatpush2.msra.mxu0 0.0
      %536 = vmatprep.subr.mxu0 0.0
      %537 = vmatpush2.msra.mxu0 0.0
      %538 = vmatprep.subr.mxu0 0.0
      %539 = vmatpush2.msra.mxu0 0.0
      %540 = vmatprep.subr.mxu0 0.0
      %541 = vmatpush2.msra.mxu0 0.0
      %542 = vmatprep.subr.mxu0 0.0
      %543 = vmatpush2.msra.mxu0 0.0
      %544 = vmatprep.subr.mxu0 0.0
      %545 = vmatpush2.msra.mxu0 0.0
      %546 = vmatprep.subr.mxu0 0.0
      %547 = vmatpush2.msra.mxu0 0.0
      %548 = vmatprep.mubr.f32.mxu0 0.0
      %549 = vmatmul.mubr.f32.gmra.mxu0 %v42
      %v550 = vpop.f32.mrf.mxu0
      %v551 = vadd.f32 0.0, %v550
      %v552 = vpop.f32.mrf.mxu0
      %v553 = vadd.f32 0.0, %v552
      %554 = vdwg.mxu0
      %555 = vmatprep.subr.mxu0 %v346
      %556 = vmatpush1.msra.mxu0 %v345
      %557 = vmatprep.subr.mxu0 %v342
      %558 = vmatpush1.msra.mxu0 %v341
      %559 = vmatprep.subr.mxu0 %v338
      %560 = vmatpush1.msra.mxu0 %v337
      %561 = vmatprep.subr.mxu0 %v334
      %562 = vmatpush1.msra.mxu0 %v333
      %563 = vmatprep.subr.mxu0 %v330
      %564 = vmatpush1.msra.mxu0 %v329
      %565 = vmatprep.subr.mxu0 %v326
      %566 = vmatpush1.msra.mxu0 %v325
      %567 = vmatprep.subr.mxu0 %v322
      %568 = vmatpush1.msra.mxu0 %v321
      %569 = vmatprep.subr.mxu0 %v318
      %570 = vmatpush1.msra.mxu0 %v317
      %571 = vmatprep.subr.mxu0 %v314
      %572 = vmatpush1.msra.mxu0 %v313
      %573 = vmatprep.subr.mxu0 %v310
      %574 = vmatpush1.msra.mxu0 %v309
      %575 = vmatprep.subr.mxu0 %v306
      %576 = vmatpush1.msra.mxu0 %v305
      %577 = vmatprep.subr.mxu0 %v302
      %578 = vmatpush1.msra.mxu0 %v301
      %579 = vmatprep.subr.mxu0 %v298
      %580 = vmatpush1.msra.mxu0 %v297
      %581 = vmatprep.subr.mxu0 %v294
      %582 = vmatpush1.msra.mxu0 %v293
      %583 = vmatprep.subr.mxu0 %v290
      %584 = vmatpush1.msra.mxu0 %v289
      %585 = vmatprep.subr.mxu0 %v286
      %586 = vmatpush1.msra.mxu0 %v285
      %587 = vmatprep.subr.mxu0 0.0
      %588 = vmatpush2.msra.mxu0 0.0
      %589 = vmatprep.subr.mxu0 0.0
      %590 = vmatpush2.msra.mxu0 0.0
      %591 = vmatprep.subr.mxu0 0.0
      %592 = vmatpush2.msra.mxu0 0.0
      %593 = vmatprep.subr.mxu0 0.0
      %594 = vmatpush2.msra.mxu0 0.0
      %595 = vmatprep.subr.mxu0 0.0
      %596 = vmatpush2.msra.mxu0 0.0
      %597 = vmatprep.subr.mxu0 0.0
      %598 = vmatpush2.msra.mxu0 0.0
      %599 = vmatprep.subr.mxu0 0.0
      %600 = vmatpush2.msra.mxu0 0.0
      %601 = vmatprep.subr.mxu0 0.0
      %602 = vmatpush2.msra.mxu0 0.0
      %603 = vmatprep.subr.mxu0 0.0
      %604 = vmatpush2.msra.mxu0 0.0
      %605 = vmatprep.subr.mxu0 0.0
      %606 = vmatpush2.msra.mxu0 0.0
      %607 = vmatprep.subr.mxu0 0.0
      %608 = vmatpush2.msra.mxu0 0.0
      %609 = vmatprep.subr.mxu0 0.0
      %610 = vmatpush2.msra.mxu0 0.0
      %611 = vmatprep.subr.mxu0 0.0
      %612 = vmatpush2.msra.mxu0 0.0
      %613 = vmatprep.subr.mxu0 0.0
      %614 = vmatpush2.msra.mxu0 0.0
      %615 = vmatprep.subr.mxu0 0.0
      %616 = vmatpush2.msra.mxu0 0.0
      %617 = vmatprep.subr.mxu0 0.0
      %618 = vmatpush2.msra.mxu0 0.0
      %619 = vmatprep.mubr.f32.mxu0 0.0
      %620 = vmatmul.mubr.f32.gmra.mxu0 %v284
      %v621 = vpop.f32.mrf.mxu0
      %v622 = vadd.f32 %v480, %v621
      %v623 = vpop.f32.mrf.mxu0
      %v624 = vadd.f32 %v482, %v623
      %625 = vdwg.mxu0
      %626 = vmatprep.subr.mxu0 %v348
      %627 = vmatpush1.msra.mxu0 %v347
      %628 = vmatprep.subr.mxu0 %v344
      %629 = vmatpush1.msra.mxu0 %v343
      %630 = vmatprep.subr.mxu0 %v340
      %631 = vmatpush1.msra.mxu0 %v339
      %632 = vmatprep.subr.mxu0 %v336
      %633 = vmatpush1.msra.mxu0 %v335
      %634 = vmatprep.subr.mxu0 %v332
      %635 = vmatpush1.msra.mxu0 %v331
      %636 = vmatprep.subr.mxu0 %v328
      %637 = vmatpush1.msra.mxu0 %v327
      %638 = vmatprep.subr.mxu0 %v324
      %639 = vmatpush1.msra.mxu0 %v323
      %640 = vmatprep.subr.mxu0 %v320
      %641 = vmatpush1.msra.mxu0 %v319
      %642 = vmatprep.subr.mxu0 %v316
      %643 = vmatpush1.msra.mxu0 %v315
      %644 = vmatprep.subr.mxu0 %v312
      %645 = vmatpush1.msra.mxu0 %v311
      %646 = vmatprep.subr.mxu0 %v308
      %647 = vmatpush1.msra.mxu0 %v307
      %648 = vmatprep.subr.mxu0 %v304
      %649 = vmatpush1.msra.mxu0 %v303
      %650 = vmatprep.subr.mxu0 %v300
      %651 = vmatpush1.msra.mxu0 %v299
      %652 = vmatprep.subr.mxu0 %v296
      %653 = vmatpush1.msra.mxu0 %v295
      %654 = vmatprep.subr.mxu0 %v292
      %655 = vmatpush1.msra.mxu0 %v291
      %656 = vmatprep.subr.mxu0 %v288
      %657 = vmatpush1.msra.mxu0 %v287
      %658 = vmatprep.subr.mxu0 0.0
      %659 = vmatpush2.msra.mxu0 0.0
      %660 = vmatprep.subr.mxu0 0.0
      %661 = vmatpush2.msra.mxu0 0.0
      %662 = vmatprep.subr.mxu0 0.0
      %663 = vmatpush2.msra.mxu0 0.0
      %664 = vmatprep.subr.mxu0 0.0
      %665 = vmatpush2.msra.mxu0 0.0
      %666 = vmatprep.subr.mxu0 0.0
      %667 = vmatpush2.msra.mxu0 0.0
      %668 = vmatprep.subr.mxu0 0.0
      %669 = vmatpush2.msra.mxu0 0.0
      %670 = vmatprep.subr.mxu0 0.0
      %671 = vmatpush2.msra.mxu0 0.0
      %672 = vmatprep.subr.mxu0 0.0
      %673 = vmatpush2.msra.mxu0 0.0
      %674 = vmatprep.subr.mxu0 0.0
      %675 = vmatpush2.msra.mxu0 0.0
      %676 = vmatprep.subr.mxu0 0.0
      %677 = vmatpush2.msra.mxu0 0.0
      %678 = vmatprep.subr.mxu0 0.0
      %679 = vmatpush2.msra.mxu0 0.0
      %680 = vmatprep.subr.mxu0 0.0
      %681 = vmatpush2.msra.mxu0 0.0
      %682 = vmatprep.subr.mxu0 0.0
      %683 = vmatpush2.msra.mxu0 0.0
      %684 = vmatprep.subr.mxu0 0.0
      %685 = vmatpush2.msra.mxu0 0.0
      %686 = vmatprep.subr.mxu0 0.0
      %687 = vmatpush2.msra.mxu0 0.0
      %688 = vmatprep.subr.mxu0 0.0
      %689 = vmatpush2.msra.mxu0 0.0
      %690 = vmatprep.mubr.f32.mxu0 0.0
      %691 = vmatmul.mubr.f32.gmra.mxu0 %v284
      %v692 = vpop.f32.mrf.mxu0
      %v693 = vadd.f32 %v551, %v692
      %v694 = vpop.f32.mrf.mxu0
      %v695 = vadd.f32 %v553, %v694
      %696 = vdwg.mxu0
      %v697 = vld [vmem:[%s4] sm:$0xff]
      %v698 = vld [vmem:[%s4 + $0x8] sm:$0xff]
      %v699 = vld [vmem:[%s4 + $0x10] sm:$0xff]
      %v700 = vld [vmem:[%s4 + $0x18] sm:$0xff]
      %v701 = vadd.f32 %v622, %v697
      %v702 = vadd.f32 %v624, %v698
      %v703 = vadd.f32 %v693, %v699
      %v704 = vadd.f32 %v695, %v700
      %v705 = vxor.u32 %v701, 2147483648
      %v706 = vmul.f32 %v705, 1.442695
      %v707 = vpow.pop %v706
      %v708 = vadd.f32 %v707, 1.0
      %v709 = vrcp.pop %v708
      %v710 = vmul.f32 1.0, %v709
      %v711 = vxor.u32 %v702, 2147483648
      %v712 = vmul.f32 %v711, 1.442695
      %v713 = vpow.pop %v712
      %v714 = vadd.f32 %v713, 1.0
      %v715 = vrcp.pop %v714
      %v716 = vmul.f32 1.0, %v715
      %v717 = vtanh.pop %v703
      %v718 = vxor.u32 %v704, 2147483648
      %v719 = vmul.f32 %v718, 1.442695
      %v720 = vpow.pop %v719
      %v721 = vadd.f32 %v720, 1.0
      %v722 = vrcp.pop %v721
      %v723 = vmul.f32 1.0, %v722
      %v724 = vmul.f32 %v716, %v43
      %v725 = vmul.f32 %v710, %v717
      %v726 = vadd.f32 %v724, %v725
      %v727 = vtanh.pop %v726
      %v728 = vmul.f32 %v723, %v727
      %s729 = smul.u32 %s35, 8
      %s730 = scalar_lea.vmem %s5, %s729
      %731 = vst [vmem:[%s730] sm:$0xff] %v728
    $region30: #{decoder_rnn_forward.4} parent=1 // loop_footer
      %s39 = sadd.s32 1, %s35
    $region31: #{decoder_rnn_forward.4} parent=1 // loop_footer_branch
      %34 = sbr.rel target = $region27
    $region32: #{decoder_rnn_forward.4} parent=1 // loop_exit
      _
    // Predicated region
    $region33: #{decoder_rnn_forward.4} parent=1 // pred_check
      _
    $region34: #{decoder_rnn_forward.4} parent=1 // pred_check_branch
      %733 = sbr.rel (0) target = $region36
    $region35: #{decoder_rnn_forward.4} parent=1 // pred_region
      _
    $region36: #{decoder_rnn_forward.4} parent=1 // pred_fallthru
      _
    // Predicated region
    $region37: #{decoder_rnn_forward.4} parent=1 // pred_check
      _
    $region38: #{decoder_rnn_forward.4} parent=1 // pred_check_branch
      %735 = sbr.rel (0) target = $region40
    $region39: #{decoder_rnn_forward.4} parent=1 // pred_region
      _
    $region40: #{decoder_rnn_forward.4} parent=1 // pred_fallthru
      _
    %736 = vsyncpa [#allocation3], 1

</llo_original>
